<compile_context>
chip_gen: v7x
topology: tpu7x:2x2x1
jax: 0.10.0
libtpu: 0.0.40
codegen_flags: <defaults>
</compile_context>

<pallas_src>
import functools

import jax
import jax.numpy as jnp
from jax.experimental import pallas as pl
from jax.experimental.pallas import tpu as pltpu


def _round_up(x, m):
    return ((x + m - 1) // m) * m


# ----------------------------------------------------------------------------
# Pallas kernel: the entire autoencoder in a single call.
# refs = (x, A0, ..., A5, bias_pack, out); everything is VMEM-resident.
# ----------------------------------------------------------------------------
def _fused_autoenc_kernel(*refs, n_dims):
    x_ref = refs[0]
    bias_ref = refs[-2]
    o_ref = refs[-1]
    num_layers = len(n_dims)

    h = x_ref[...]                                           # (TB, K0) f32
    for l in range(num_layers):
        a_ref = refs[1 + l]                                  # (K_l, N_l) bf16
        # bf16 MXU matmul with f32 accumulation.
        h = jnp.dot(h.astype(jnp.bfloat16), a_ref[...],
                    preferred_element_type=jnp.float32)      # (TB, N_l) f32
        h = h + bias_ref[l:l + 1, :n_dims[l]]                # f32 bias add
        if l < num_layers - 1:                               # ReLU on all but last
            h = jnp.maximum(h, 0.0)
    o_ref[...] = h.astype(o_ref.dtype)                       # lane-dense store


# ----------------------------------------------------------------------------
# Weight folding: Conv2d / ConvTranspose2d  ->  dense (Cin*H*W, Cout*Ho*Wo)
# matrix over flattened NCHW activations (exact; zero-padding handled by
# dropping out-of-range taps).  Pure one-time weight-side preprocessing.
# ----------------------------------------------------------------------------
def _tap_index_map(n_in, n_out, stride, pad, k, transposed):
    i_in = jnp.arange(n_in)
    i_out = jnp.arange(n_out)
    if transposed:   # ConvTranspose2d:  k = o - s*i + p
        kk = i_out[None, :] - stride * i_in[:, None] + pad
    else:            # Conv2d:           k = i - s*o + p
        kk = i_in[:, None] - stride * i_out[None, :] + pad
    valid = (kk >= 0) & (kk < k)
    return jnp.clip(kk, 0, k - 1), valid


def _fold_conv_layer(w_oihw, bias, h_in, w_in, stride, pad, transposed):
    """w_oihw: (Cout, Cin, kH, kW). Returns (A, bias_row, Cout, Hout, Wout)."""
    c_out, c_in, k_h, k_w = w_oihw.shape
    if transposed:
        h_out = (h_in - 1) * stride - 2 * pad + k_h
        w_out = (w_in - 1) * stride - 2 * pad + k_w
    else:
        h_out = (h_in + 2 * pad - k_h) // stride + 1
        w_out = (w_in + 2 * pad - k_w) // stride + 1
    kh, vh = _tap_index_map(h_in, h_out, stride, pad, k_h, transposed)
    kw, vw = _tap_index_map(w_in, w_out, stride, pad, k_w, transposed)
    g = w_oihw[:, :, kh, :]                      # (Cout, Cin, Hin, Hout, kW)
    g = g[:, :, :, :, kw]                        # (Cout, Cin, Hin, Hout, Win, Wout)
    mask = (vh[:, :, None, None] & vw[None, None, :, :]).astype(g.dtype)
    g = g * mask[None, None]
    mat = jnp.transpose(g, (1, 2, 4, 0, 3, 5)).reshape(
        c_in * h_in * w_in, c_out * h_out * w_out)
    b_row = jnp.broadcast_to(bias[:, None], (c_out, h_out * w_out)).reshape(1, -1)
    return mat, b_row, c_out, h_out, w_out


_LAYERS = (("enc0", False), ("enc1", False), ("enc2", False),
           ("dec0", True), ("dec1", True), ("dec2", True))


def fold_autencc_params(params, height, width):
    """One-time weight folding.

    Returns (mats, bias_pack, out_chw):
      mats      : tuple of bf16 (K_pad, N_pad) matrices, K/N padded to 128.
      bias_pack : (8, max_N_pad) f32 -- row l holds layer-l bias (zero padded).
      out_chw   : (Cout, Hout, Wout) of the network output.
    """
    mats, biases = [], []
    h_cur, w_cur = height, width
    c_out = None
    for name, transposed in _LAYERS:
        wgt, bias = params[name]
        if transposed:                            # (Cin,Cout,k,k) -> (Cout,Cin,k,k)
            wgt = jnp.transpose(wgt, (1, 0, 2, 3))
        mat, b_row, c_out, h_cur, w_cur = _fold_conv_layer(
            wgt, bias, h_cur, w_cur, stride=2, pad=1, transposed=transposed)
        mats.append(mat)
        biases.append(b_row)

    # Pad K / N to multiples of 128 (lane-dense matmuls & store).  Padded rows
    # and columns are exactly zero -- also exactly zero after the bf16 cast --
    # so results are unchanged.  Cast the big A matrices to bf16 for the MXU.
    mats_p, biases_p = [], []
    for mat, b_row in zip(mats, biases):
        k_dim, n_dim = mat.shape
        k_pad, n_pad = _round_up(k_dim, 128), _round_up(n_dim, 128)
        mats_p.append(
            jnp.pad(mat, ((0, k_pad - k_dim), (0, n_pad - n_dim)))
            .astype(jnp.bfloat16))
        biases_p.append(jnp.pad(b_row, ((0, 0), (0, n_pad - n_dim))))

    # Pack the six (1, N) bias rows into one sublane-aligned (8, max_N) block.
    max_n_pad = max(b.shape[1] for b in biases_p)
    bias_pack = jnp.zeros((8, max_n_pad), jnp.float32)
    for l, b_row in enumerate(biases_p):
        bias_pack = bias_pack.at[l, :b_row.shape[1]].set(b_row[0])

    return tuple(mats_p), bias_pack, (c_out, h_cur, w_cur)


# ----------------------------------------------------------------------------
# Fused forward pass (single pallas_call).  NCHW in, NCHW out.
# ----------------------------------------------------------------------------
def autencc_apply(mats, bias_pack, x_nchw, out_chw):
    num_layers = len(mats)
    batch = x_nchw.shape[0]
    k_in = x_nchw.shape[1] * x_nchw.shape[2] * x_nchw.shape[3]
    k_in_pad = mats[0].shape[0]
    n_out_pad = mats[-1].shape[1]
    max_n_pad = bias_pack.shape[1]
    c_out, h_out, w_out = out_chw
    n_out = c_out * h_out * w_out
    n_dims = tuple(int(m.shape[1]) for m in mats)

    # Batch tile: full-array block for tiny batches (no padding at all);
    # otherwise aim for >=2 grid steps (v7x megacore) with a cap of 256 rows.
    if batch <= 8:
        tb = batch
    else:
        tb = min(256, _round_up(pl.cdiv(batch, 2), 8))
    batch_pad = _round_up(batch, tb)

    x_flat = x_nchw.reshape(batch, k_in).astype(jnp.float32)
    if batch_pad != batch or k_in_pad != k_in:
        # Only pad when strictly needed (k_in=768 is already lane-aligned for
        # the 3x16x16 input, and tb divides the batch in the common cases).
        x_flat = jnp.pad(x_flat, ((0, batch_pad - batch), (0, k_in_pad - k_in)))

    operands = [x_flat]
    in_specs = [pl.BlockSpec((tb, k_in_pad), lambda i: (i, 0))]
    for mat in mats:                              # weights stay VMEM-resident
        operands.append(mat)
        in_specs.append(pl.BlockSpec(mat.shape, lambda i: (0, 0)))
    operands.append(bias_pack)
    in_specs.append(pl.BlockSpec(bias_pack.shape, lambda i: (0, 0)))

    # Explicit VMEM budget: 2x (constant) weight/bias blocks + double-buffered
    # x / out tiles + intermediate activations, with generous margin.
    weight_bytes = sum(int(m.size) * m.dtype.itemsize for m in mats)
    weight_bytes += int(bias_pack.size) * bias_pack.dtype.itemsize
    act_bytes = tb * max(k_in_pad, max_n_pad) * 4
    vmem_limit = (2 * weight_bytes + 2 * tb * k_in_pad * 4
                  + 2 * tb * n_out_pad * 4 + 6 * act_bytes + (4 << 20))
    vmem_limit = int(min(max(vmem_limit, 32 << 20), 64 << 20))

    out = pl.pallas_call(
        functools.partial(_fused_autoenc_kernel, n_dims=n_dims),
        out_shape=jax.ShapeDtypeStruct((batch_pad, n_out_pad), jnp.float32),
        grid=(batch_pad // tb,),
        in_specs=in_specs,
        out_specs=pl.BlockSpec((tb, n_out_pad), lambda i: (i, 0)),
        compiler_params=pltpu.CompilerParams(
            dimension_semantics=("parallel",),
            vmem_limit_bytes=vmem_limit),
    )(*operands)

    return out[:batch, :n_out].reshape(batch, c_out, h_out, w_out)


def make_autencc_forward(params, height, width):
    """Fold weights ONCE; return a jitted forward whose hot path is a single
    fused pallas_call (folding never re-runs in steady state)."""
    mats, bias_pack, out_chw = fold_autencc_params(params, height, width)
    apply_fn = jax.jit(functools.partial(autencc_apply, out_chw=out_chw))

    def forward(x_nchw):
        return apply_fn(mats, bias_pack, x_nchw)

    return forward


# ----------------------------------------------------------------------------
# Parameter construction (deterministic, PyTorch-like uniform +-1/sqrt(fan_in))
# ----------------------------------------------------------------------------
def _make_conv_params(key, cout, cin, k):
    kw, kb = jax.random.split(key)
    bound = 1.0 / jnp.sqrt(cin * k * k)
    w = jax.random.uniform(kw, (cout, cin, k, k), jnp.float32, -bound, bound)
    b = jax.random.uniform(kb, (cout,), jnp.float32, -bound, bound)
    return w, b


def _make_convT_params(key, cin, cout, k):
    kw, kb = jax.random.split(key)
    bound = 1.0 / jnp.sqrt(cin * k * k)
    w = jax.random.uniform(kw, (cin, cout, k, k), jnp.float32, -bound, bound)
    b = jax.random.uniform(kb, (cout,), jnp.float32, -bound, bound)
    return w, b


def init_autencc_params(key):
    keys = jax.random.split(key, 6)
    return {
        "enc0": _make_conv_params(keys[0], 5, 3, 4),
        "enc1": _make_conv_params(keys[1], 7, 5, 4),
        "enc2": _make_conv_params(keys[2], 10, 7, 4),
        "dec0": _make_convT_params(keys[3], 10, 7, 4),
        "dec1": _make_convT_params(keys[4], 7, 5, 4),
        "dec2": _make_convT_params(keys[5], 5, 2, 4),
    }


# ----------------------------------------------------------------------------
# Pure-XLA reference (PyTorch semantics) for a correctness self-check.
# ----------------------------------------------------------------------------
def _reference_forward(params, x):
    prec = jax.lax.Precision.HIGHEST

    def conv(x, w, b, relu):
        y = jax.lax.conv_general_dilated(
            x, w, (2, 2), ((1, 1), (1, 1)),
            dimension_numbers=("NCHW", "OIHW", "NCHW"), precision=prec)
        y = y + b[None, :, None, None]
        return jnp.maximum(y, 0.0) if relu else y

    def convT(x, w, b, relu):
        w_conv = jnp.transpose(w, (1, 0, 2, 3))[:, :, ::-1, ::-1]
        y = jax.lax.conv_general_dilated(
            x, w_conv, (1, 1), ((2, 2), (2, 2)), lhs_dilation=(2, 2),
            dimension_numbers=("NCHW", "OIHW", "NCHW"), precision=prec)
        y = y + b[None, :, None, None]
        return jnp.maximum(y, 0.0) if relu else y

    x = conv(x, *params["enc0"], True)
    x = conv(x, *params["enc1"], True)
    x = conv(x, *params["enc2"], True)
    x = convT(x, *params["dec0"], True)
    x = convT(x, *params["dec1"], True)
    x = convT(x, *params["dec2"], False)
    return x


if __name__ == "__main__":
    key = jax.random.PRNGKey(0)
    k_params, k_x = jax.random.split(key)

    params = init_autencc_params(k_params)
    x = jax.random.normal(k_x, (2, 3, 16, 16), jnp.float32)   # NCHW, Cin=3

    # One-time weight folding + jitted fused apply (the hot path).
    forward = make_autencc_forward(params, x.shape[2], x.shape[3])

    out = jax.block_until_ready(forward(x))
    assert out.shape == (2, 2, 16, 16), out.shape
    assert out.dtype == jnp.float32

    ref = _reference_forward(params, x)
    max_err = float(jnp.max(jnp.abs(out - ref)))
    # bf16 MXU matmuls (f32 accumulation) vs an f32-HIGHEST XLA reference.
    assert max_err < 2e-2, f"max abs err vs XLA conv reference: {max_err}"

    print("KERNEL_OK")
</pallas_src>

<mosaic_0001>
module attributes {stable_mosaic.version = 11 : i64} {
  func.func @_fused_autoenc_kernel(%arg0: i32, %arg1: memref<2x768xf32, #tpu.memory_space<vmem>>, %arg2: memref<768x384xbf16, #tpu.memory_space<vmem>>, %arg3: memref<384x128xbf16, #tpu.memory_space<vmem>>, %arg4: memref<128x128xbf16, #tpu.memory_space<vmem>>, %arg5: memref<128x128xbf16, #tpu.memory_space<vmem>>, %arg6: memref<128x384xbf16, #tpu.memory_space<vmem>>, %arg7: memref<384x512xbf16, #tpu.memory_space<vmem>>, %arg8: memref<8x512xf32, #tpu.memory_space<vmem>>, %arg9: memref<2x512xf32, #tpu.memory_space<vmem>>) attributes {dimension_semantics = [#tpu.dimension_semantics<parallel>], iteration_bounds = array<i64: 1>, scalar_prefetch = 0 : i64, scratch_operands = 0 : i64, tpu.core_type = #tpu.core_type<tc>, window_params = [{transform_indices = @transform_0, window_bounds = array<i64: 2, 768>}, {pipeline_mode = #tpu.pipeline_mode<synchronous>, transform_indices = @transform_1, window_bounds = array<i64: 768, 384>}, {pipeline_mode = #tpu.pipeline_mode<synchronous>, transform_indices = @transform_2, window_bounds = array<i64: 384, 128>}, {pipeline_mode = #tpu.pipeline_mode<synchronous>, transform_indices = @transform_3, window_bounds = array<i64: 128, 128>}, {pipeline_mode = #tpu.pipeline_mode<synchronous>, transform_indices = @transform_4, window_bounds = array<i64: 128, 128>}, {pipeline_mode = #tpu.pipeline_mode<synchronous>, transform_indices = @transform_5, window_bounds = array<i64: 128, 384>}, {pipeline_mode = #tpu.pipeline_mode<synchronous>, transform_indices = @transform_6, window_bounds = array<i64: 384, 512>}, {pipeline_mode = #tpu.pipeline_mode<synchronous>, transform_indices = @transform_7, window_bounds = array<i64: 8, 512>}, {transform_indices = @transform_8, window_bounds = array<i64: 2, 512>}]} {
    %c0 = arith.constant 0 : index
    %c0_0 = arith.constant 0 : index
    %0 = vector.load %arg1[%c0, %c0_0] : memref<2x768xf32, #tpu.memory_space<vmem>>, vector<2x768xf32>
    %1 = arith.truncf %0 : vector<2x768xf32> to vector<2x768xbf16>
    %c0_1 = arith.constant 0 : index
    %c0_2 = arith.constant 0 : index
    %2 = vector.load %arg2[%c0_1, %c0_2] : memref<768x384xbf16, #tpu.memory_space<vmem>>, vector<768x384xbf16>
    %cst = arith.constant dense<0.000000e+00> : vector<2x384xf32>
    %3 = tpu.matmul %1, %2, %cst {dimension_numbers = #tpu.dot_dimension_numbers<[1], [0], [0], [1], [0, 0, 1, 1], [], []>} : vector<2x768xbf16>, vector<768x384xbf16>, vector<2x384xf32> -> vector<2x384xf32>
    %c0_3 = arith.constant 0 : index
    %c0_4 = arith.constant 0 : index
    %4 = vector.load %arg8[%c0_3, %c0_4] : memref<8x512xf32, #tpu.memory_space<vmem>>, vector<1x384xf32>
    %5 = vector.broadcast %4 : vector<1x384xf32> to vector<2x384xf32>
    %6 = arith.addf %3, %5 : vector<2x384xf32>
    %cst_5 = arith.constant 0.000000e+00 : f32
    %7 = vector.broadcast %cst_5 : f32 to vector<2x384xf32>
    %8 = arith.maximumf %6, %7 : vector<2x384xf32>
    %9 = arith.truncf %8 : vector<2x384xf32> to vector<2x384xbf16>
    %c0_6 = arith.constant 0 : index
    %c0_7 = arith.constant 0 : index
    %10 = vector.load %arg3[%c0_6, %c0_7] : memref<384x128xbf16, #tpu.memory_space<vmem>>, vector<384x128xbf16>
    %cst_8 = arith.constant dense<0.000000e+00> : vector<2x128xf32>
    %11 = tpu.matmul %9, %10, %cst_8 {dimension_numbers = #tpu.dot_dimension_numbers<[1], [0], [0], [1], [0, 0, 1, 1], [], []>} : vector<2x384xbf16>, vector<384x128xbf16>, vector<2x128xf32> -> vector<2x128xf32>
    %c1 = arith.constant 1 : index
    %c0_9 = arith.constant 0 : index
    %12 = vector.load %arg8[%c1, %c0_9] : memref<8x512xf32, #tpu.memory_space<vmem>>, vector<1x128xf32>
    %13 = vector.broadcast %12 : vector<1x128xf32> to vector<2x128xf32>
    %14 = arith.addf %11, %13 : vector<2x128xf32>
    %cst_10 = arith.constant 0.000000e+00 : f32
    %15 = vector.broadcast %cst_10 : f32 to vector<2x128xf32>
    %16 = arith.maximumf %14, %15 : vector<2x128xf32>
    %17 = arith.truncf %16 : vector<2x128xf32> to vector<2x128xbf16>
    %c0_11 = arith.constant 0 : index
    %c0_12 = arith.constant 0 : index
    %18 = vector.load %arg4[%c0_11, %c0_12] : memref<128x128xbf16, #tpu.memory_space<vmem>>, vector<128x128xbf16>
    %cst_13 = arith.constant dense<0.000000e+00> : vector<2x128xf32>
    %19 = tpu.matmul %17, %18, %cst_13 {dimension_numbers = #tpu.dot_dimension_numbers<[1], [0], [0], [1], [0, 0, 1, 1], [], []>} : vector<2x128xbf16>, vector<128x128xbf16>, vector<2x128xf32> -> vector<2x128xf32>
    %c2 = arith.constant 2 : index
    %c0_14 = arith.constant 0 : index
    %20 = vector.load %arg8[%c2, %c0_14] : memref<8x512xf32, #tpu.memory_space<vmem>>, vector<1x128xf32>
    %21 = vector.broadcast %20 : vector<1x128xf32> to vector<2x128xf32>
    %22 = arith.addf %19, %21 : vector<2x128xf32>
    %cst_15 = arith.constant 0.000000e+00 : f32
    %23 = vector.broadcast %cst_15 : f32 to vector<2x128xf32>
    %24 = arith.maximumf %22, %23 : vector<2x128xf32>
    %25 = arith.truncf %24 : vector<2x128xf32> to vector<2x128xbf16>
    %c0_16 = arith.constant 0 : index
    %c0_17 = arith.constant 0 : index
    %26 = vector.load %arg5[%c0_16, %c0_17] : memref<128x128xbf16, #tpu.memory_space<vmem>>, vector<128x128xbf16>
    %cst_18 = arith.constant dense<0.000000e+00> : vector<2x128xf32>
    %27 = tpu.matmul %25, %26, %cst_18 {dimension_numbers = #tpu.dot_dimension_numbers<[1], [0], [0], [1], [0, 0, 1, 1], [], []>} : vector<2x128xbf16>, vector<128x128xbf16>, vector<2x128xf32> -> vector<2x128xf32>
    %c3 = arith.constant 3 : index
    %c0_19 = arith.constant 0 : index
    %28 = vector.load %arg8[%c3, %c0_19] : memref<8x512xf32, #tpu.memory_space<vmem>>, vector<1x128xf32>
    %29 = vector.broadcast %28 : vector<1x128xf32> to vector<2x128xf32>
    %30 = arith.addf %27, %29 : vector<2x128xf32>
    %cst_20 = arith.constant 0.000000e+00 : f32
    %31 = vector.broadcast %cst_20 : f32 to vector<2x128xf32>
    %32 = arith.maximumf %30, %31 : vector<2x128xf32>
    %33 = arith.truncf %32 : vector<2x128xf32> to vector<2x128xbf16>
    %c0_21 = arith.constant 0 : index
    %c0_22 = arith.constant 0 : index
    %34 = vector.load %arg6[%c0_21, %c0_22] : memref<128x384xbf16, #tpu.memory_space<vmem>>, vector<128x384xbf16>
    %cst_23 = arith.constant dense<0.000000e+00> : vector<2x384xf32>
    %35 = tpu.matmul %33, %34, %cst_23 {dimension_numbers = #tpu.dot_dimension_numbers<[1], [0], [0], [1], [0, 0, 1, 1], [], []>} : vector<2x128xbf16>, vector<128x384xbf16>, vector<2x384xf32> -> vector<2x384xf32>
    %c4 = arith.constant 4 : index
    %c0_24 = arith.constant 0 : index
    %36 = vector.load %arg8[%c4, %c0_24] : memref<8x512xf32, #tpu.memory_space<vmem>>, vector<1x384xf32>
    %37 = vector.broadcast %36 : vector<1x384xf32> to vector<2x384xf32>
    %38 = arith.addf %35, %37 : vector<2x384xf32>
    %cst_25 = arith.constant 0.000000e+00 : f32
    %39 = vector.broadcast %cst_25 : f32 to vector<2x384xf32>
    %40 = arith.maximumf %38, %39 : vector<2x384xf32>
    %41 = arith.truncf %40 : vector<2x384xf32> to vector<2x384xbf16>
    %c0_26 = arith.constant 0 : index
    %c0_27 = arith.constant 0 : index
    %42 = vector.load %arg7[%c0_26, %c0_27] : memref<384x512xbf16, #tpu.memory_space<vmem>>, vector<384x512xbf16>
    %cst_28 = arith.constant dense<0.000000e+00> : vector<2x512xf32>
    %43 = tpu.matmul %41, %42, %cst_28 {dimension_numbers = #tpu.dot_dimension_numbers<[1], [0], [0], [1], [0, 0, 1, 1], [], []>} : vector<2x384xbf16>, vector<384x512xbf16>, vector<2x512xf32> -> vector<2x512xf32>
    %c5 = arith.constant 5 : index
    %c0_29 = arith.constant 0 : index
    %44 = vector.load %arg8[%c5, %c0_29] : memref<8x512xf32, #tpu.memory_space<vmem>>, vector<1x512xf32>
    %45 = vector.broadcast %44 : vector<1x512xf32> to vector<2x512xf32>
    %46 = arith.addf %43, %45 : vector<2x512xf32>
    %c0_30 = arith.constant 0 : index
    %c0_31 = arith.constant 0 : index
    %47 = vector.load %arg9[%c0_30, %c0_31] : memref<2x512xf32, #tpu.memory_space<vmem>>, vector<2x512xf32>
    tpu.vector_store %arg9[%c0_30, %c0_31], %46 {strides = array<i32>} : memref<2x512xf32, #tpu.memory_space<vmem>>, vector<2x512xf32>,
    return
  }
  func.func @transform_0(%arg0: i32) -> (i32, i32) {
    %c0_i32 = arith.constant 0 : i32
    %c0_i32_0 = arith.constant 0 : i32
    return %arg0, %c0_i32 : i32, i32
  }
  func.func @transform_1(%arg0: i32) -> (i32, i32) {
    %c0_i32 = arith.constant 0 : i32
    %c0_i32_0 = arith.constant 0 : i32
    %c0_i32_1 = arith.constant 0 : i32
    return %c0_i32, %c0_i32_0 : i32, i32
  }
  func.func @transform_2(%arg0: i32) -> (i32, i32) {
    %c0_i32 = arith.constant 0 : i32
    %c0_i32_0 = arith.constant 0 : i32
    %c0_i32_1 = arith.constant 0 : i32
    return %c0_i32, %c0_i32_0 : i32, i32
  }
  func.func @transform_3(%arg0: i32) -> (i32, i32) {
    %c0_i32 = arith.constant 0 : i32
    %c0_i32_0 = arith.constant 0 : i32
    %c0_i32_1 = arith.constant 0 : i32
    return %c0_i32, %c0_i32_0 : i32, i32
  }
  func.func @transform_4(%arg0: i32) -> (i32, i32) {
    %c0_i32 = arith.constant 0 : i32
    %c0_i32_0 = arith.constant 0 : i32
    %c0_i32_1 = arith.constant 0 : i32
    return %c0_i32, %c0_i32_0 : i32, i32
  }
  func.func @transform_5(%arg0: i32) -> (i32, i32) {
    %c0_i32 = arith.constant 0 : i32
    %c0_i32_0 = arith.constant 0 : i32
    %c0_i32_1 = arith.constant 0 : i32
    return %c0_i32, %c0_i32_0 : i32, i32
  }
  func.func @transform_6(%arg0: i32) -> (i32, i32) {
    %c0_i32 = arith.constant 0 : i32
    %c0_i32_0 = arith.constant 0 : i32
    %c0_i32_1 = arith.constant 0 : i32
    return %c0_i32, %c0_i32_0 : i32, i32
  }
  func.func @transform_7(%arg0: i32) -> (i32, i32) {
    %c0_i32 = arith.constant 0 : i32
    %c0_i32_0 = arith.constant 0 : i32
    %c0_i32_1 = arith.constant 0 : i32
    return %c0_i32, %c0_i32_0 : i32, i32
  }
  func.func @transform_8(%arg0: i32) -> (i32, i32) {
    %c0_i32 = arith.constant 0 : i32
    %c0_i32_0 = arith.constant 0 : i32
    return %arg0, %c0_i32 : i32, i32
  }
}

</mosaic_0001>

<llo_original>
// kernel: autencc_apply.1
$region0: #{autencc_apply.1}
  #allocation0 [shape = 'u32[]', space=smem, size = 0x4, offset = 0x4, fixed_abs, tag = 'smem constant byte address 0x4 - core index']
  #allocation1 [shape = 'u32[144,128]{1,0:T(1,128)}', space=vmem, size = 0x12000, scoped, tag = 'internal scratch']
  %s0 = inlined_call_operand.vmem [shape: f32[2,768], index: 0, kind: input, shape index: {}]
  %s1 = inlined_call_operand.hbm [shape: bf16[768,384], index: 1, kind: input, shape index: {}]
  %s2 = inlined_call_operand.hbm [shape: bf16[384,128], index: 2, kind: input, shape index: {}]
  %s3 = inlined_call_operand.vmem [shape: bf16[128,128], index: 3, kind: input, shape index: {}]
  %s4 = inlined_call_operand.hbm [shape: bf16[128,128], index: 4, kind: input, shape index: {}]
  %s5 = inlined_call_operand.hbm [shape: bf16[128,384], index: 5, kind: input, shape index: {}]
  %s6 = inlined_call_operand.hbm [shape: bf16[384,512], index: 6, kind: input, shape index: {}]
  %s7 = inlined_call_operand.vmem [shape: f32[8,512], index: 7, kind: input, shape index: {}]
  %s8 = inlined_call_operand.vmem [shape: f32[2,512], index: 8, kind: output, shape index: {}]
  %s9 = sld [smem:[#allocation0]]
  $region62: #{autencc_apply.1} parent=0
    _
  %s11 = ssub.s32 1, %s9
  %s12 = scalar_select 0, %s11, %s9
  $region1: #{autencc_apply.1} parent=0
    #allocation2 [shape = 'u8[589824]{0}', space=vmem, size = 0x90000, scoped, tag = 'input window, operand 1, single buffered']
    #allocation3 [shape = 's32[1]{0}', space=sflag, size = 0x4, scoped, tag = 'scoped memory for autencc_apply.1']
    #allocation4 [shape = 'u8[98304]{0}', space=vmem, size = 0x18000, scoped, tag = 'input window, operand 2, single buffered']
    #allocation5 [shape = 's32[1]{0}', space=sflag, size = 0x4, scoped, tag = 'scoped memory for autencc_apply.1']
    #allocation6 [shape = 'u8[32768]{0}', space=vmem, size = 0x8000, scoped, tag = 'input window, operand 4, single buffered']
    #allocation7 [shape = 'u8[98304]{0}', space=vmem, size = 0x18000, scoped, tag = 'input window, operand 5, single buffered']
    #allocation8 [shape = 's32[1]{0}', space=sflag, size = 0x4, scoped, tag = 'scoped memory for autencc_apply.1']
    #allocation9 [shape = 'u8[393216]{0}', space=vmem, size = 0x60000, scoped, tag = 'input window, operand 6, single buffered']
    %13 = vsyncpa [#allocation3], 0
    %14 = vsyncpa [#allocation5], 0
    %15 = vsyncpa [#allocation8], 0
    // Predicated region
    $region2: #{autencc_apply.1} parent=1 // pred_check
      _
    $region3: #{autencc_apply.1} parent=1 // pred_check_branch
      %17 = sbr.rel (0) target = $region5
    $region4: #{autencc_apply.1} parent=1 // pred_region
      _
    $region5: #{autencc_apply.1} parent=1 // pred_fallthru
      _
    // Predicated region
    $region6: #{autencc_apply.1} parent=1 // pred_check
      _
    $region7: #{autencc_apply.1} parent=1 // pred_check_branch
      %19 = sbr.rel (0) target = $region9
    $region8: #{autencc_apply.1} parent=1 // pred_region
      %s21 = ssub.s32 18432, 18432
      %22 = vsyncadd [#allocation3], %s21
      %s23 = sshll.u32 [#allocation2], 4
      %s24 = int_to_ptr.vmem [resolvable:$true] %s23
      %29 = dma.hbm_to_vmem [thread:$0]  %s1, 18432, %s24, [#allocation3], 192, 192, 12
    $region9: #{autencc_apply.1} parent=1 // pred_fallthru
      _
    // Predicated region
    $region10: #{autencc_apply.1} parent=1 // pred_check
      _
    $region11: #{autencc_apply.1} parent=1 // pred_check_branch
      %31 = sbr.rel (0) target = $region13
    $region12: #{autencc_apply.1} parent=1 // pred_region
      %s33 = ssub.s32 3072, 3072
      %34 = vsyncadd [#allocation5], %s33
      %s35 = sshll.u32 [#allocation4], 4
      %s36 = int_to_ptr.vmem [resolvable:$true] %s35
      %41 = dma.hbm_to_vmem [thread:$0]  %s2, 3072, %s36, [#allocation5], 64, 64, 4
    $region13: #{autencc_apply.1} parent=1 // pred_fallthru
      _
    // Predicated region
    $region14: #{autencc_apply.1} parent=1 // pred_check
      _
    $region15: #{autencc_apply.1} parent=1 // pred_check_branch
      %43 = sbr.rel (0) target = $region17
    $region16: #{autencc_apply.1} parent=1 // pred_region
      _
    $region17: #{autencc_apply.1} parent=1 // pred_fallthru
      _
    // Predicated region
    $region18: #{autencc_apply.1} parent=1 // pred_check
      _
    $region19: #{autencc_apply.1} parent=1 // pred_check_branch
      %45 = sbr.rel (0) target = $region21
    $region20: #{autencc_apply.1} parent=1 // pred_region
      %s47 = ssub.s32 1024, 1024
      %48 = vsyncadd [#allocation5], %s47
      %s49 = sshll.u32 [#allocation6], 4
      %s50 = int_to_ptr.vmem [resolvable:$true] %s49
      %55 = dma.hbm_to_vmem [thread:$0]  %s4, 1024, %s50, [#allocation5], 64, 64, 4
    $region21: #{autencc_apply.1} parent=1 // pred_fallthru
      _
    // Predicated region
    $region22: #{autencc_apply.1} parent=1 // pred_check
      _
    $region23: #{autencc_apply.1} parent=1 // pred_check_branch
      %57 = sbr.rel (0) target = $region25
    $region24: #{autencc_apply.1} parent=1 // pred_region
      %s59 = ssub.s32 3072, 3072
      %60 = vsyncadd [#allocation8], %s59
      %s61 = sshll.u32 [#allocation7], 4
      %s62 = int_to_ptr.vmem [resolvable:$true] %s61
      %67 = dma.hbm_to_vmem [thread:$0]  %s5, 3072, %s62, [#allocation8], 192, 192, 12
    $region25: #{autencc_apply.1} parent=1 // pred_fallthru
      _
    // Predicated region
    $region26: #{autencc_apply.1} parent=1 // pred_check
      _
    $region27: #{autencc_apply.1} parent=1 // pred_check_branch
      %69 = sbr.rel (0) target = $region29
    $region28: #{autencc_apply.1} parent=1 // pred_region
      %s71 = ssub.s32 12288, 12288
      %72 = vsyncadd [#allocation8], %s71
      %s73 = sshll.u32 [#allocation9], 4
      %s74 = int_to_ptr.vmem [resolvable:$true] %s73
      %79 = dma.hbm_to_vmem [thread:$0]  %s6, 12288, %s74, [#allocation8], 256, 256, 16
    $region29: #{autencc_apply.1} parent=1 // pred_fallthru
      _
    // Predicated region
    $region30: #{autencc_apply.1} parent=1 // pred_check
      _
    $region31: #{autencc_apply.1} parent=1 // pred_check_branch
      %81 = sbr.rel (0) target = $region33
    $region32: #{autencc_apply.1} parent=1 // pred_region
      _
    $region33: #{autencc_apply.1} parent=1 // pred_fallthru
      _
    // Predicated region
    $region34: #{autencc_apply.1} parent=1 // pred_check
      _
    $region35: #{autencc_apply.1} parent=1 // pred_check_branch
      %83 = sbr.rel (0) target = $region37
    $region36: #{autencc_apply.1} parent=1 // pred_region
      %84 = dma.done [#allocation3], 18432
    $region37: #{autencc_apply.1} parent=1 // pred_fallthru
      _
    // Predicated region
    $region38: #{autencc_apply.1} parent=1 // pred_check
      _
    $region39: #{autencc_apply.1} parent=1 // pred_check_branch
      %86 = sbr.rel (0) target = $region41
    $region40: #{autencc_apply.1} parent=1 // pred_region
      %87 = dma.done [#allocation5], 3072
    $region41: #{autencc_apply.1} parent=1 // pred_fallthru
      _
    // Predicated region
    $region42: #{autencc_apply.1} parent=1 // pred_check
      _
    $region43: #{autencc_apply.1} parent=1 // pred_check_branch
      %89 = sbr.rel (0) target = $region45
    $region44: #{autencc_apply.1} parent=1 // pred_region
      %90 = dma.done [#allocation5], 1024
    $region45: #{autencc_apply.1} parent=1 // pred_fallthru
      _
    // Predicated region
    $region46: #{autencc_apply.1} parent=1 // pred_check
      _
    $region47: #{autencc_apply.1} parent=1 // pred_check_branch
      %92 = sbr.rel (0) target = $region49
    $region48: #{autencc_apply.1} parent=1 // pred_region
      %93 = dma.done [#allocation8], 3072
    $region49: #{autencc_apply.1} parent=1 // pred_fallthru
      _
    // Predicated region
    $region50: #{autencc_apply.1} parent=1 // pred_check
      _
    $region51: #{autencc_apply.1} parent=1 // pred_check_branch
      %95 = sbr.rel (0) target = $region53
    $region52: #{autencc_apply.1} parent=1 // pred_region
      %96 = dma.done [#allocation8], 12288
    $region53: #{autencc_apply.1} parent=1 // pred_fallthru
      _
    %v98 = vld [vmem:[%s0] sm:$0xff]
    %v99 = vld [vmem:[%s0 + $0x8] sm:$0xf]
    %v102 = vcombine.high %v98, %v98
    %v104 = vunpack.c.l.s4 1983009808
    %v105 = vunpack.c.0.s8 %v104
    %v106 = vlaneseq
    %v107 = vshrl.u32 %v106, 7
    %v108 = vsub.s32 %v105, %v107
    %v109 = vrot.slane %v98, %v108
    %v111 = vunpack.c.l.s4 1983009808
    %v112 = vunpack.c.0.s8 %v111
    %v113 = vlaneseq
    %v114 = vshrl.u32 %v113, 7
    %v115 = vsub.s32 %v112, %v114
    %v116 = vrot.slane %v102, %v115
    %v117 = vcombine.high %v109, %v109
    %v118 = vcombine.high %v116, %v116
    %v120 = vunpack.c.l.s4 1983009808
    %v121 = vunpack.c.0.s8 %v120
    %v122 = vlaneseq
    %v123 = vshrl.u32 %v122, 7
    %v124 = vsub.s32 %v121, %v123
    %v125 = vrot.slane %v99, %v124
    %v126 = vcombine.high %v125, %v125
    %v133 = vpack.c.bf16 %v109, %v109
    %v134 = vpack.c.bf16 %v117, %v117
    %v135 = vpack.c.bf16 %v116, %v116
    %v136 = vpack.c.bf16 %v118, %v118
    %v137 = vpack.c.bf16 %v125, %v125
    %v138 = vpack.c.bf16 %v126, %v126
    %v139 = vld [vmem:[#allocation2] sm:$0xff]
    %v140 = vld [vmem:[#allocation2 + $0x8] sm:$0xf]
    %v141 = vld [vmem:[#allocation2 + $0xc] sm:$0xff]
    %v142 = vld [vmem:[#allocation2 + $0x14] sm:$0xf]
    %v143 = vld [vmem:[#allocation2 + $0x18] sm:$0xff]
    %v144 = vld [vmem:[#allocation2 + $0x20] sm:$0xf]
    %v145 = vld [vmem:[#allocation2 + $0x24] sm:$0xff]
    %v146 = vld [vmem:[#allocation2 + $0x2c] sm:$0xf]
    %v147 = vld [vmem:[#allocation2 + $0x30] sm:$0xff]
    %v148 = vld [vmem:[#allocation2 + $0x38] sm:$0xf]
    %v149 = vld [vmem:[#allocation2 + $0x3c] sm:$0xff]
    %v150 = vld [vmem:[#allocation2 + $0x44] sm:$0xf]
    %v151 = vld [vmem:[#allocation2 + $0x48] sm:$0xff]
    %v152 = vld [vmem:[#allocation2 + $0x50] sm:$0xf]
    %v153 = vld [vmem:[#allocation2 + $0x54] sm:$0xff]
    %v154 = vld [vmem:[#allocation2 + $0x5c] sm:$0xf]
    %v155 = vld [vmem:[#allocation2 + $0x60] sm:$0xff]
    %v156 = vld [vmem:[#allocation2 + $0x68] sm:$0xf]
    %v157 = vld [vmem:[#allocation2 + $0x6c] sm:$0xff]
    %v158 = vld [vmem:[#allocation2 + $0x74] sm:$0xf]
    %v159 = vld [vmem:[#allocation2 + $0x78] sm:$0xff]
    %v160 = vld [vmem:[#allocation2 + $0x80] sm:$0xf]
    %v161 = vld [vmem:[#allocation2 + $0x84] sm:$0xff]
    %v162 = vld [vmem:[#allocation2 + $0x8c] sm:$0xf]
    %v163 = vld [vmem:[#allocation2 + $0x90] sm:$0xff]
    %v164 = vld [vmem:[#allocation2 + $0x98] sm:$0xf]
    %v165 = vld [vmem:[#allocation2 + $0x9c] sm:$0xff]
    %v166 = vld [vmem:[#allocation2 + $0xa4] sm:$0xf]
    %v167 = vld [vmem:[#allocation2 + $0xa8] sm:$0xff]
    %v168 = vld [vmem:[#allocation2 + $0xb0] sm:$0xf]
    %v169 = vld [vmem:[#allocation2 + $0xb4] sm:$0xff]
    %v170 = vld [vmem:[#allocation2 + $0xbc] sm:$0xf]
    %v171 = vld [vmem:[#allocation2 + $0xc0] sm:$0xff]
    %v172 = vld [vmem:[#allocation2 + $0xc8] sm:$0xf]
    %v173 = vld [vmem:[#allocation2 + $0xcc] sm:$0xff]
    %v174 = vld [vmem:[#allocation2 + $0xd4] sm:$0xf]
    %v175 = vld [vmem:[#allocation2 + $0xd8] sm:$0xff]
    %v176 = vld [vmem:[#allocation2 + $0xe0] sm:$0xf]
    %v177 = vld [vmem:[#allocation2 + $0xe4] sm:$0xff]
    %v178 = vld [vmem:[#allocation2 + $0xec] sm:$0xf]
    %v179 = vld [vmem:[#allocation2 + $0xf0] sm:$0xff]
    %v180 = vld [vmem:[#allocation2 + $0xf8] sm:$0xf]
    %v181 = vld [vmem:[#allocation2 + $0xfc] sm:$0xff]
    %v182 = vld [vmem:[#allocation2 + $0x104] sm:$0xf]
    %v183 = vld [vmem:[#allocation2 + $0x108] sm:$0xff]
    %v184 = vld [vmem:[#allocation2 + $0x110] sm:$0xf]
    %v185 = vld [vmem:[#allocation2 + $0x114] sm:$0xff]
    %v186 = vld [vmem:[#allocation2 + $0x11c] sm:$0xf]
    %v187 = vld [vmem:[#allocation2 + $0x120] sm:$0xff]
    %v188 = vld [vmem:[#allocation2 + $0x128] sm:$0xf]
    %v189 = vld [vmem:[#allocation2 + $0x12c] sm:$0xff]
    %v190 = vld [vmem:[#allocation2 + $0x134] sm:$0xf]
    %v191 = vld [vmem:[#allocation2 + $0x138] sm:$0xff]
    %v192 = vld [vmem:[#allocation2 + $0x140] sm:$0xf]
    %v193 = vld [vmem:[#allocation2 + $0x144] sm:$0xff]
    %v194 = vld [vmem:[#allocation2 + $0x14c] sm:$0xf]
    %v195 = vld [vmem:[#allocation2 + $0x150] sm:$0xff]
    %v196 = vld [vmem:[#allocation2 + $0x158] sm:$0xf]
    %v197 = vld [vmem:[#allocation2 + $0x15c] sm:$0xff]
    %v198 = vld [vmem:[#allocation2 + $0x164] sm:$0xf]
    %v199 = vld [vmem:[#allocation2 + $0x168] sm:$0xff]
    %v200 = vld [vmem:[#allocation2 + $0x170] sm:$0xf]
    %v201 = vld [vmem:[#allocation2 + $0x174] sm:$0xff]
    %v202 = vld [vmem:[#allocation2 + $0x17c] sm:$0xf]
    %v203 = vld [vmem:[#allocation2 + $0x180] sm:$0xff]
    %v204 = vld [vmem:[#allocation2 + $0x188] sm:$0xf]
    %v205 = vld [vmem:[#allocation2 + $0x18c] sm:$0xff]
    %v206 = vld [vmem:[#allocation2 + $0x194] sm:$0xf]
    %v207 = vld [vmem:[#allocation2 + $0x198] sm:$0xff]
    %v208 = vld [vmem:[#allocation2 + $0x1a0] sm:$0xf]
    %v209 = vld [vmem:[#allocation2 + $0x1a4] sm:$0xff]
    %v210 = vld [vmem:[#allocation2 + $0x1ac] sm:$0xf]
    %v211 = vld [vmem:[#allocation2 + $0x1b0] sm:$0xff]
    %v212 = vld [vmem:[#allocation2 + $0x1b8] sm:$0xf]
    %v213 = vld [vmem:[#allocation2 + $0x1bc] sm:$0xff]
    %v214 = vld [vmem:[#allocation2 + $0x1c4] sm:$0xf]
    %v215 = vld [vmem:[#allocation2 + $0x1c8] sm:$0xff]
    %v216 = vld [vmem:[#allocation2 + $0x1d0] sm:$0xf]
    %v217 = vld [vmem:[#allocation2 + $0x1d4] sm:$0xff]
    %v218 = vld [vmem:[#allocation2 + $0x1dc] sm:$0xf]
    %v219 = vld [vmem:[#allocation2 + $0x1e0] sm:$0xff]
    %v220 = vld [vmem:[#allocation2 + $0x1e8] sm:$0xf]
    %v221 = vld [vmem:[#allocation2 + $0x1ec] sm:$0xff]
    %v222 = vld [vmem:[#allocation2 + $0x1f4] sm:$0xf]
    %v223 = vld [vmem:[#allocation2 + $0x1f8] sm:$0xff]
    %v224 = vld [vmem:[#allocation2 + $0x200] sm:$0xf]
    %v225 = vld [vmem:[#allocation2 + $0x204] sm:$0xff]
    %v226 = vld [vmem:[#allocation2 + $0x20c] sm:$0xf]
    %v227 = vld [vmem:[#allocation2 + $0x210] sm:$0xff]
    %v228 = vld [vmem:[#allocation2 + $0x218] sm:$0xf]
    %v229 = vld [vmem:[#allocation2 + $0x21c] sm:$0xff]
    %v230 = vld [vmem:[#allocation2 + $0x224] sm:$0xf]
    %v231 = vld [vmem:[#allocation2 + $0x228] sm:$0xff]
    %v232 = vld [vmem:[#allocation2 + $0x230] sm:$0xf]
    %v233 = vld [vmem:[#allocation2 + $0x234] sm:$0xff]
    %v234 = vld [vmem:[#allocation2 + $0x23c] sm:$0xf]
    %v235 = vld [vmem:[#allocation2 + $0x240] sm:$0xff]
    %v236 = vld [vmem:[#allocation2 + $0x248] sm:$0xf]
    %v237 = vld [vmem:[#allocation2 + $0x24c] sm:$0xff]
    %v238 = vld [vmem:[#allocation2 + $0x254] sm:$0xf]
    %v239 = vld [vmem:[#allocation2 + $0x258] sm:$0xff]
    %v240 = vld [vmem:[#allocation2 + $0x260] sm:$0xf]
    %v241 = vld [vmem:[#allocation2 + $0x264] sm:$0xff]
    %v242 = vld [vmem:[#allocation2 + $0x26c] sm:$0xf]
    %v243 = vld [vmem:[#allocation2 + $0x270] sm:$0xff]
    %v244 = vld [vmem:[#allocation2 + $0x278] sm:$0xf]
    %v245 = vld [vmem:[#allocation2 + $0x27c] sm:$0xff]
    %v246 = vld [vmem:[#allocation2 + $0x284] sm:$0xf]
    %v247 = vld [vmem:[#allocation2 + $0x288] sm:$0xff]
    %v248 = vld [vmem:[#allocation2 + $0x290] sm:$0xf]
    %v249 = vld [vmem:[#allocation2 + $0x294] sm:$0xff]
    %v250 = vld [vmem:[#allocation2 + $0x29c] sm:$0xf]
    %v251 = vld [vmem:[#allocation2 + $0x2a0] sm:$0xff]
    %v252 = vld [vmem:[#allocation2 + $0x2a8] sm:$0xf]
    %v253 = vld [vmem:[#allocation2 + $0x2ac] sm:$0xff]
    %v254 = vld [vmem:[#allocation2 + $0x2b4] sm:$0xf]
    %v255 = vld [vmem:[#allocation2 + $0x2b8] sm:$0xff]
    %v256 = vld [vmem:[#allocation2 + $0x2c0] sm:$0xf]
    %v257 = vld [vmem:[#allocation2 + $0x2c4] sm:$0xff]
    %v258 = vld [vmem:[#allocation2 + $0x2cc] sm:$0xf]
    %v259 = vld [vmem:[#allocation2 + $0x2d0] sm:$0xff]
    %v260 = vld [vmem:[#allocation2 + $0x2d8] sm:$0xf]
    %v261 = vld [vmem:[#allocation2 + $0x2dc] sm:$0xff]
    %v262 = vld [vmem:[#allocation2 + $0x2e4] sm:$0xf]
    %v263 = vld [vmem:[#allocation2 + $0x2e8] sm:$0xff]
    %v264 = vld [vmem:[#allocation2 + $0x2f0] sm:$0xf]
    %v265 = vld [vmem:[#allocation2 + $0x2f4] sm:$0xff]
    %v266 = vld [vmem:[#allocation2 + $0x2fc] sm:$0xf]
    %v267 = vld [vmem:[#allocation2 + $0x300] sm:$0xff]
    %v268 = vld [vmem:[#allocation2 + $0x308] sm:$0xf]
    %v269 = vld [vmem:[#allocation2 + $0x30c] sm:$0xff]
    %v270 = vld [vmem:[#allocation2 + $0x314] sm:$0xf]
    %v271 = vld [vmem:[#allocation2 + $0x318] sm:$0xff]
    %v272 = vld [vmem:[#allocation2 + $0x320] sm:$0xf]
    %v273 = vld [vmem:[#allocation2 + $0x324] sm:$0xff]
    %v274 = vld [vmem:[#allocation2 + $0x32c] sm:$0xf]
    %v275 = vld [vmem:[#allocation2 + $0x330] sm:$0xff]
    %v276 = vld [vmem:[#allocation2 + $0x338] sm:$0xf]
    %v277 = vld [vmem:[#allocation2 + $0x33c] sm:$0xff]
    %v278 = vld [vmem:[#allocation2 + $0x344] sm:$0xf]
    %v279 = vld [vmem:[#allocation2 + $0x348] sm:$0xff]
    %v280 = vld [vmem:[#allocation2 + $0x350] sm:$0xf]
    %v281 = vld [vmem:[#allocation2 + $0x354] sm:$0xff]
    %v282 = vld [vmem:[#allocation2 + $0x35c] sm:$0xf]
    %v283 = vld [vmem:[#allocation2 + $0x360] sm:$0xff]
    %v284 = vld [vmem:[#allocation2 + $0x368] sm:$0xf]
    %v285 = vld [vmem:[#allocation2 + $0x36c] sm:$0xff]
    %v286 = vld [vmem:[#allocation2 + $0x374] sm:$0xf]
    %v287 = vld [vmem:[#allocation2 + $0x378] sm:$0xff]
    %v288 = vld [vmem:[#allocation2 + $0x380] sm:$0xf]
    %v289 = vld [vmem:[#allocation2 + $0x384] sm:$0xff]
    %v290 = vld [vmem:[#allocation2 + $0x38c] sm:$0xf]
    %v291 = vld [vmem:[#allocation2 + $0x390] sm:$0xff]
    %v292 = vld [vmem:[#allocation2 + $0x398] sm:$0xf]
    %v293 = vld [vmem:[#allocation2 + $0x39c] sm:$0xff]
    %v294 = vld [vmem:[#allocation2 + $0x3a4] sm:$0xf]
    %v295 = vld [vmem:[#allocation2 + $0x3a8] sm:$0xff]
    %v296 = vld [vmem:[#allocation2 + $0x3b0] sm:$0xf]
    %v297 = vld [vmem:[#allocation2 + $0x3b4] sm:$0xff]
    %v298 = vld [vmem:[#allocation2 + $0x3bc] sm:$0xf]
    %v299 = vld [vmem:[#allocation2 + $0x3c0] sm:$0xff]
    %v300 = vld [vmem:[#allocation2 + $0x3c8] sm:$0xf]
    %v301 = vld [vmem:[#allocation2 + $0x3cc] sm:$0xff]
    %v302 = vld [vmem:[#allocation2 + $0x3d4] sm:$0xf]
    %v303 = vld [vmem:[#allocation2 + $0x3d8] sm:$0xff]
    %v304 = vld [vmem:[#allocation2 + $0x3e0] sm:$0xf]
    %v305 = vld [vmem:[#allocation2 + $0x3e4] sm:$0xff]
    %v306 = vld [vmem:[#allocation2 + $0x3ec] sm:$0xf]
    %v307 = vld [vmem:[#allocation2 + $0x3f0] sm:$0xff]
    %v308 = vld [vmem:[#allocation2 + $0x3f8] sm:$0xf]
    %v309 = vld [vmem:[#allocation2 + $0x3fc] sm:$0xff]
    %v310 = vld [vmem:[#allocation2 + $0x404] sm:$0xf]
    %v311 = vld [vmem:[#allocation2 + $0x408] sm:$0xff]
    %v312 = vld [vmem:[#allocation2 + $0x410] sm:$0xf]
    %v313 = vld [vmem:[#allocation2 + $0x414] sm:$0xff]
    %v314 = vld [vmem:[#allocation2 + $0x41c] sm:$0xf]
    %v315 = vld [vmem:[#allocation2 + $0x420] sm:$0xff]
    %v316 = vld [vmem:[#allocation2 + $0x428] sm:$0xf]
    %v317 = vld [vmem:[#allocation2 + $0x42c] sm:$0xff]
    %v318 = vld [vmem:[#allocation2 + $0x434] sm:$0xf]
    %v319 = vld [vmem:[#allocation2 + $0x438] sm:$0xff]
    %v320 = vld [vmem:[#allocation2 + $0x440] sm:$0xf]
    %v321 = vld [vmem:[#allocation2 + $0x444] sm:$0xff]
    %v322 = vld [vmem:[#allocation2 + $0x44c] sm:$0xf]
    %v323 = vld [vmem:[#allocation2 + $0x450] sm:$0xff]
    %v324 = vld [vmem:[#allocation2 + $0x458] sm:$0xf]
    %v325 = vld [vmem:[#allocation2 + $0x45c] sm:$0xff]
    %v326 = vld [vmem:[#allocation2 + $0x464] sm:$0xf]
    %v327 = vld [vmem:[#allocation2 + $0x468] sm:$0xff]
    %v328 = vld [vmem:[#allocation2 + $0x470] sm:$0xf]
    %v329 = vld [vmem:[#allocation2 + $0x474] sm:$0xff]
    %v330 = vld [vmem:[#allocation2 + $0x47c] sm:$0xf]
    %v331 = vld [vmem:[%s7] ss:$8 sm:$0x7]
    %v333 = vlaneseq
    %v334 = vshrl.u32 %v333, 7
    %v335 = vsub.s32 0, %v334
    %v336 = vrot.slane %v331, %v335
    %v337 = vlaneseq
    %v338 = vshrl.u32 %v337, 7
    %v339 = vsub.s32 1, %v338
    %v340 = vrot.slane %v331, %v339
    %v341 = vlaneseq
    %v342 = vshrl.u32 %v341, 7
    %v343 = vsub.s32 2, %v342
    %v344 = vrot.slane %v331, %v343
    %v540 = vunpack.c.l.b16 %v139
    %v541 = vunpack.c.h.b16 %v139
    %v542 = vunpack.c.l.b16 %v140
    %v543 = vunpack.c.l.b16 %v141
    %v544 = vunpack.c.h.b16 %v141
    %v545 = vunpack.c.l.b16 %v142
    %v546 = vunpack.c.l.b16 %v143
    %v547 = vunpack.c.h.b16 %v143
    %v548 = vunpack.c.l.b16 %v144
    %v549 = vunpack.c.l.b16 %v145
    %v550 = vunpack.c.h.b16 %v145
    %v551 = vunpack.c.l.b16 %v146
    %v552 = vunpack.c.l.b16 %v147
    %v553 = vunpack.c.h.b16 %v147
    %v554 = vunpack.c.l.b16 %v148
    %v555 = vunpack.c.l.b16 %v149
    %v556 = vunpack.c.h.b16 %v149
    %v557 = vunpack.c.l.b16 %v150
    %v558 = vunpack.c.l.b16 %v151
    %v559 = vunpack.c.h.b16 %v151
    %v560 = vunpack.c.l.b16 %v152
    %v561 = vunpack.c.l.b16 %v153
    %v562 = vunpack.c.h.b16 %v153
    %v563 = vunpack.c.l.b16 %v154
    %v564 = vunpack.c.l.b16 %v155
    %v565 = vunpack.c.h.b16 %v155
    %v566 = vunpack.c.l.b16 %v156
    %v567 = vunpack.c.l.b16 %v157
    %v568 = vunpack.c.h.b16 %v157
    %v569 = vunpack.c.l.b16 %v158
    %v570 = vunpack.c.l.b16 %v159
    %v571 = vunpack.c.h.b16 %v159
    %v572 = vunpack.c.l.b16 %v160
    %v573 = vunpack.c.l.b16 %v161
    %v574 = vunpack.c.h.b16 %v161
    %v575 = vunpack.c.l.b16 %v162
    %v576 = vunpack.c.l.b16 %v163
    %v577 = vunpack.c.h.b16 %v163
    %v578 = vunpack.c.l.b16 %v164
    %v579 = vunpack.c.l.b16 %v165
    %v580 = vunpack.c.h.b16 %v165
    %v581 = vunpack.c.l.b16 %v166
    %v582 = vunpack.c.l.b16 %v167
    %v583 = vunpack.c.h.b16 %v167
    %v584 = vunpack.c.l.b16 %v168
    %v585 = vunpack.c.l.b16 %v169
    %v586 = vunpack.c.h.b16 %v169
    %v587 = vunpack.c.l.b16 %v170
    %v588 = vunpack.c.l.b16 %v171
    %v589 = vunpack.c.h.b16 %v171
    %v590 = vunpack.c.l.b16 %v172
    %v591 = vunpack.c.l.b16 %v173
    %v592 = vunpack.c.h.b16 %v173
    %v593 = vunpack.c.l.b16 %v174
    %v594 = vunpack.c.l.b16 %v175
    %v595 = vunpack.c.h.b16 %v175
    %v596 = vunpack.c.l.b16 %v176
    %v597 = vunpack.c.l.b16 %v177
    %v598 = vunpack.c.h.b16 %v177
    %v599 = vunpack.c.l.b16 %v178
    %v600 = vunpack.c.l.b16 %v179
    %v601 = vunpack.c.h.b16 %v179
    %v602 = vunpack.c.l.b16 %v180
    %v603 = vunpack.c.l.b16 %v181
    %v604 = vunpack.c.h.b16 %v181
    %v605 = vunpack.c.l.b16 %v182
    %v606 = vunpack.c.l.b16 %v183
    %v607 = vunpack.c.h.b16 %v183
    %v608 = vunpack.c.l.b16 %v184
    %v609 = vunpack.c.l.b16 %v185
    %v610 = vunpack.c.h.b16 %v185
    %v611 = vunpack.c.l.b16 %v186
    %v612 = vunpack.c.l.b16 %v187
    %v613 = vunpack.c.h.b16 %v187
    %v614 = vunpack.c.l.b16 %v188
    %v615 = vunpack.c.l.b16 %v189
    %v616 = vunpack.c.h.b16 %v189
    %v617 = vunpack.c.l.b16 %v190
    %v618 = vunpack.c.l.b16 %v191
    %v619 = vunpack.c.h.b16 %v191
    %v620 = vunpack.c.l.b16 %v192
    %v621 = vunpack.c.l.b16 %v193
    %v622 = vunpack.c.h.b16 %v193
    %v623 = vunpack.c.l.b16 %v194
    %v624 = vunpack.c.l.b16 %v195
    %v625 = vunpack.c.h.b16 %v195
    %v626 = vunpack.c.l.b16 %v196
    %v627 = vunpack.c.l.b16 %v197
    %v628 = vunpack.c.h.b16 %v197
    %v629 = vunpack.c.l.b16 %v198
    %v630 = vunpack.c.l.b16 %v199
    %v631 = vunpack.c.h.b16 %v199
    %v632 = vunpack.c.l.b16 %v200
    %v633 = vunpack.c.l.b16 %v201
    %v634 = vunpack.c.h.b16 %v201
    %v635 = vunpack.c.l.b16 %v202
    %v636 = vunpack.c.l.b16 %v203
    %v637 = vunpack.c.h.b16 %v203
    %v638 = vunpack.c.l.b16 %v204
    %v639 = vunpack.c.l.b16 %v205
    %v640 = vunpack.c.h.b16 %v205
    %v641 = vunpack.c.l.b16 %v206
    %v642 = vunpack.c.l.b16 %v207
    %v643 = vunpack.c.h.b16 %v207
    %v644 = vunpack.c.l.b16 %v208
    %v645 = vunpack.c.l.b16 %v209
    %v646 = vunpack.c.h.b16 %v209
    %v647 = vunpack.c.l.b16 %v210
    %v648 = vunpack.c.l.b16 %v211
    %v649 = vunpack.c.h.b16 %v211
    %v650 = vunpack.c.l.b16 %v212
    %v651 = vunpack.c.l.b16 %v213
    %v652 = vunpack.c.h.b16 %v213
    %v653 = vunpack.c.l.b16 %v214
    %v654 = vunpack.c.l.b16 %v215
    %v655 = vunpack.c.h.b16 %v215
    %v656 = vunpack.c.l.b16 %v216
    %v657 = vunpack.c.l.b16 %v217
    %v658 = vunpack.c.h.b16 %v217
    %v659 = vunpack.c.l.b16 %v218
    %v660 = vunpack.c.l.b16 %v219
    %v661 = vunpack.c.h.b16 %v219
    %v662 = vunpack.c.l.b16 %v220
    %v663 = vunpack.c.l.b16 %v221
    %v664 = vunpack.c.h.b16 %v221
    %v665 = vunpack.c.l.b16 %v222
    %v666 = vunpack.c.l.b16 %v223
    %v667 = vunpack.c.h.b16 %v223
    %v668 = vunpack.c.l.b16 %v224
    %v669 = vunpack.c.l.b16 %v225
    %v670 = vunpack.c.h.b16 %v225
    %v671 = vunpack.c.l.b16 %v226
    %v672 = vunpack.c.l.b16 %v227
    %v673 = vunpack.c.h.b16 %v227
    %v674 = vunpack.c.l.b16 %v228
    %v675 = vunpack.c.l.b16 %v229
    %v676 = vunpack.c.h.b16 %v229
    %v677 = vunpack.c.l.b16 %v230
    %v678 = vunpack.c.l.b16 %v231
    %v679 = vunpack.c.h.b16 %v231
    %v680 = vunpack.c.l.b16 %v232
    %v681 = vunpack.c.l.b16 %v233
    %v682 = vunpack.c.h.b16 %v233
    %v683 = vunpack.c.l.b16 %v234
    %v684 = vunpack.c.l.b16 %v235
    %v685 = vunpack.c.h.b16 %v235
    %v686 = vunpack.c.l.b16 %v236
    %v687 = vunpack.c.l.b16 %v237
    %v688 = vunpack.c.h.b16 %v237
    %v689 = vunpack.c.l.b16 %v238
    %v690 = vunpack.c.l.b16 %v239
    %v691 = vunpack.c.h.b16 %v239
    %v692 = vunpack.c.l.b16 %v240
    %v693 = vunpack.c.l.b16 %v241
    %v694 = vunpack.c.h.b16 %v241
    %v695 = vunpack.c.l.b16 %v242
    %v696 = vunpack.c.l.b16 %v243
    %v697 = vunpack.c.h.b16 %v243
    %v698 = vunpack.c.l.b16 %v244
    %v699 = vunpack.c.l.b16 %v245
    %v700 = vunpack.c.h.b16 %v245
    %v701 = vunpack.c.l.b16 %v246
    %v702 = vunpack.c.l.b16 %v247
    %v703 = vunpack.c.h.b16 %v247
    %v704 = vunpack.c.l.b16 %v248
    %v705 = vunpack.c.l.b16 %v249
    %v706 = vunpack.c.h.b16 %v249
    %v707 = vunpack.c.l.b16 %v250
    %v708 = vunpack.c.l.b16 %v251
    %v709 = vunpack.c.h.b16 %v251
    %v710 = vunpack.c.l.b16 %v252
    %v711 = vunpack.c.l.b16 %v253
    %v712 = vunpack.c.h.b16 %v253
    %v713 = vunpack.c.l.b16 %v254
    %v714 = vunpack.c.l.b16 %v255
    %v715 = vunpack.c.h.b16 %v255
    %v716 = vunpack.c.l.b16 %v256
    %v717 = vunpack.c.l.b16 %v257
    %v718 = vunpack.c.h.b16 %v257
    %v719 = vunpack.c.l.b16 %v258
    %v720 = vunpack.c.l.b16 %v259
    %v721 = vunpack.c.h.b16 %v259
    %v722 = vunpack.c.l.b16 %v260
    %v723 = vunpack.c.l.b16 %v261
    %v724 = vunpack.c.h.b16 %v261
    %v725 = vunpack.c.l.b16 %v262
    %v726 = vunpack.c.l.b16 %v263
    %v727 = vunpack.c.h.b16 %v263
    %v728 = vunpack.c.l.b16 %v264
    %v729 = vunpack.c.l.b16 %v265
    %v730 = vunpack.c.h.b16 %v265
    %v731 = vunpack.c.l.b16 %v266
    %v732 = vunpack.c.l.b16 %v267
    %v733 = vunpack.c.h.b16 %v267
    %v734 = vunpack.c.l.b16 %v268
    %v735 = vunpack.c.l.b16 %v269
    %v736 = vunpack.c.h.b16 %v269
    %v737 = vunpack.c.l.b16 %v270
    %v738 = vunpack.c.l.b16 %v271
    %v739 = vunpack.c.h.b16 %v271
    %v740 = vunpack.c.l.b16 %v272
    %v741 = vunpack.c.l.b16 %v273
    %v742 = vunpack.c.h.b16 %v273
    %v743 = vunpack.c.l.b16 %v274
    %v744 = vunpack.c.l.b16 %v275
    %v745 = vunpack.c.h.b16 %v275
    %v746 = vunpack.c.l.b16 %v276
    %v747 = vunpack.c.l.b16 %v277
    %v748 = vunpack.c.h.b16 %v277
    %v749 = vunpack.c.l.b16 %v278
    %v750 = vunpack.c.l.b16 %v279
    %v751 = vunpack.c.h.b16 %v279
    %v752 = vunpack.c.l.b16 %v280
    %v753 = vunpack.c.l.b16 %v281
    %v754 = vunpack.c.h.b16 %v281
    %v755 = vunpack.c.l.b16 %v282
    %v756 = vunpack.c.l.b16 %v283
    %v757 = vunpack.c.h.b16 %v283
    %v758 = vunpack.c.l.b16 %v284
    %v759 = vunpack.c.l.b16 %v285
    %v760 = vunpack.c.h.b16 %v285
    %v761 = vunpack.c.l.b16 %v286
    %v762 = vunpack.c.l.b16 %v287
    %v763 = vunpack.c.h.b16 %v287
    %v764 = vunpack.c.l.b16 %v288
    %v765 = vunpack.c.l.b16 %v289
    %v766 = vunpack.c.h.b16 %v289
    %v767 = vunpack.c.l.b16 %v290
    %v768 = vunpack.c.l.b16 %v291
    %v769 = vunpack.c.h.b16 %v291
    %v770 = vunpack.c.l.b16 %v292
    %v771 = vunpack.c.l.b16 %v293
    %v772 = vunpack.c.h.b16 %v293
    %v773 = vunpack.c.l.b16 %v294
    %v774 = vunpack.c.l.b16 %v295
    %v775 = vunpack.c.h.b16 %v295
    %v776 = vunpack.c.l.b16 %v296
    %v777 = vunpack.c.l.b16 %v297
    %v778 = vunpack.c.h.b16 %v297
    %v779 = vunpack.c.l.b16 %v298
    %v780 = vunpack.c.l.b16 %v299
    %v781 = vunpack.c.h.b16 %v299
    %v782 = vunpack.c.l.b16 %v300
    %v783 = vunpack.c.l.b16 %v301
    %v784 = vunpack.c.h.b16 %v301
    %v785 = vunpack.c.l.b16 %v302
    %v786 = vunpack.c.l.b16 %v303
    %v787 = vunpack.c.h.b16 %v303
    %v788 = vunpack.c.l.b16 %v304
    %v789 = vunpack.c.l.b16 %v305
    %v790 = vunpack.c.h.b16 %v305
    %v791 = vunpack.c.l.b16 %v306
    %v792 = vunpack.c.l.b16 %v307
    %v793 = vunpack.c.h.b16 %v307
    %v794 = vunpack.c.l.b16 %v308
    %v795 = vunpack.c.l.b16 %v309
    %v796 = vunpack.c.h.b16 %v309
    %v797 = vunpack.c.l.b16 %v310
    %v798 = vunpack.c.l.b16 %v311
    %v799 = vunpack.c.h.b16 %v311
    %v800 = vunpack.c.l.b16 %v312
    %v801 = vunpack.c.l.b16 %v313
    %v802 = vunpack.c.h.b16 %v313
    %v803 = vunpack.c.l.b16 %v314
    %v804 = vunpack.c.l.b16 %v315
    %v805 = vunpack.c.h.b16 %v315
    %v806 = vunpack.c.l.b16 %v316
    %v807 = vunpack.c.l.b16 %v317
    %v808 = vunpack.c.h.b16 %v317
    %v809 = vunpack.c.l.b16 %v318
    %v810 = vunpack.c.l.b16 %v319
    %v811 = vunpack.c.h.b16 %v319
    %v812 = vunpack.c.l.b16 %v320
    %v813 = vunpack.c.l.b16 %v321
    %v814 = vunpack.c.h.b16 %v321
    %v815 = vunpack.c.l.b16 %v322
    %v816 = vunpack.c.l.b16 %v323
    %v817 = vunpack.c.h.b16 %v323
    %v818 = vunpack.c.l.b16 %v324
    %v819 = vunpack.c.l.b16 %v325
    %v820 = vunpack.c.h.b16 %v325
    %v821 = vunpack.c.l.b16 %v326
    %v822 = vunpack.c.l.b16 %v327
    %v823 = vunpack.c.h.b16 %v327
    %v824 = vunpack.c.l.b16 %v328
    %v825 = vunpack.c.l.b16 %v329
    %v826 = vunpack.c.h.b16 %v329
    %v827 = vunpack.c.l.b16 %v330
    %v828 = vpack.c.b16 %v543, %v540
    %v829 = vpack.c.b16 %v544, %v541
    %v830 = vpack.c.b16 %v545, %v542
    %v831 = vpack.c.b16 %v549, %v546
    %v832 = vpack.c.b16 %v550, %v547
    %v833 = vpack.c.b16 %v551, %v548
    %v834 = vpack.c.b16 %v555, %v552
    %v835 = vpack.c.b16 %v556, %v553
    %v836 = vpack.c.b16 %v557, %v554
    %v837 = vpack.c.b16 %v561, %v558
    %v838 = vpack.c.b16 %v562, %v559
    %v839 = vpack.c.b16 %v563, %v560
    %v840 = vpack.c.b16 %v567, %v564
    %v841 = vpack.c.b16 %v568, %v565
    %v842 = vpack.c.b16 %v569, %v566
    %v843 = vpack.c.b16 %v573, %v570
    %v844 = vpack.c.b16 %v574, %v571
    %v845 = vpack.c.b16 %v575, %v572
    %v846 = vpack.c.b16 %v579, %v576
    %v847 = vpack.c.b16 %v580, %v577
    %v848 = vpack.c.b16 %v581, %v578
    %v849 = vpack.c.b16 %v585, %v582
    %v850 = vpack.c.b16 %v586, %v583
    %v851 = vpack.c.b16 %v587, %v584
    %v852 = vpack.c.b16 %v591, %v588
    %v853 = vpack.c.b16 %v592, %v589
    %v854 = vpack.c.b16 %v593, %v590
    %v855 = vpack.c.b16 %v597, %v594
    %v856 = vpack.c.b16 %v598, %v595
    %v857 = vpack.c.b16 %v599, %v596
    %v858 = vpack.c.b16 %v603, %v600
    %v859 = vpack.c.b16 %v604, %v601
    %v860 = vpack.c.b16 %v605, %v602
    %v861 = vpack.c.b16 %v609, %v606
    %v862 = vpack.c.b16 %v610, %v607
    %v863 = vpack.c.b16 %v611, %v608
    %v864 = vpack.c.b16 %v615, %v612
    %v865 = vpack.c.b16 %v616, %v613
    %v866 = vpack.c.b16 %v617, %v614
    %v867 = vpack.c.b16 %v621, %v618
    %v868 = vpack.c.b16 %v622, %v619
    %v869 = vpack.c.b16 %v623, %v620
    %v870 = vpack.c.b16 %v627, %v624
    %v871 = vpack.c.b16 %v628, %v625
    %v872 = vpack.c.b16 %v629, %v626
    %v873 = vpack.c.b16 %v633, %v630
    %v874 = vpack.c.b16 %v634, %v631
    %v875 = vpack.c.b16 %v635, %v632
    %v876 = vpack.c.b16 %v639, %v636
    %v877 = vpack.c.b16 %v640, %v637
    %v878 = vpack.c.b16 %v641, %v638
    %v879 = vpack.c.b16 %v645, %v642
    %v880 = vpack.c.b16 %v646, %v643
    %v881 = vpack.c.b16 %v647, %v644
    %v882 = vpack.c.b16 %v651, %v648
    %v883 = vpack.c.b16 %v652, %v649
    %v884 = vpack.c.b16 %v653, %v650
    %v885 = vpack.c.b16 %v657, %v654
    %v886 = vpack.c.b16 %v658, %v655
    %v887 = vpack.c.b16 %v659, %v656
    %v888 = vpack.c.b16 %v663, %v660
    %v889 = vpack.c.b16 %v664, %v661
    %v890 = vpack.c.b16 %v665, %v662
    %v891 = vpack.c.b16 %v669, %v666
    %v892 = vpack.c.b16 %v670, %v667
    %v893 = vpack.c.b16 %v671, %v668
    %v894 = vpack.c.b16 %v675, %v672
    %v895 = vpack.c.b16 %v676, %v673
    %v896 = vpack.c.b16 %v677, %v674
    %v897 = vpack.c.b16 %v681, %v678
    %v898 = vpack.c.b16 %v682, %v679
    %v899 = vpack.c.b16 %v683, %v680
    %v900 = vpack.c.b16 %v687, %v684
    %v901 = vpack.c.b16 %v688, %v685
    %v902 = vpack.c.b16 %v689, %v686
    %v903 = vpack.c.b16 %v693, %v690
    %v904 = vpack.c.b16 %v694, %v691
    %v905 = vpack.c.b16 %v695, %v692
    %v906 = vpack.c.b16 %v699, %v696
    %v907 = vpack.c.b16 %v700, %v697
    %v908 = vpack.c.b16 %v701, %v698
    %v909 = vpack.c.b16 %v705, %v702
    %v910 = vpack.c.b16 %v706, %v703
    %v911 = vpack.c.b16 %v707, %v704
    %v912 = vpack.c.b16 %v711, %v708
    %v913 = vpack.c.b16 %v712, %v709
    %v914 = vpack.c.b16 %v713, %v710
    %v915 = vpack.c.b16 %v717, %v714
    %v916 = vpack.c.b16 %v718, %v715
    %v917 = vpack.c.b16 %v719, %v716
    %v918 = vpack.c.b16 %v723, %v720
    %v919 = vpack.c.b16 %v724, %v721
    %v920 = vpack.c.b16 %v725, %v722
    %v921 = vpack.c.b16 %v729, %v726
    %v922 = vpack.c.b16 %v730, %v727
    %v923 = vpack.c.b16 %v731, %v728
    %v924 = vpack.c.b16 %v735, %v732
    %v925 = vpack.c.b16 %v736, %v733
    %v926 = vpack.c.b16 %v737, %v734
    %v927 = vpack.c.b16 %v741, %v738
    %v928 = vpack.c.b16 %v742, %v739
    %v929 = vpack.c.b16 %v743, %v740
    %v930 = vpack.c.b16 %v747, %v744
    %v931 = vpack.c.b16 %v748, %v745
    %v932 = vpack.c.b16 %v749, %v746
    %v933 = vpack.c.b16 %v753, %v750
    %v934 = vpack.c.b16 %v754, %v751
    %v935 = vpack.c.b16 %v755, %v752
    %v936 = vpack.c.b16 %v759, %v756
    %v937 = vpack.c.b16 %v760, %v757
    %v938 = vpack.c.b16 %v761, %v758
    %v939 = vpack.c.b16 %v765, %v762
    %v940 = vpack.c.b16 %v766, %v763
    %v941 = vpack.c.b16 %v767, %v764
    %v942 = vpack.c.b16 %v771, %v768
    %v943 = vpack.c.b16 %v772, %v769
    %v944 = vpack.c.b16 %v773, %v770
    %v945 = vpack.c.b16 %v777, %v774
    %v946 = vpack.c.b16 %v778, %v775
    %v947 = vpack.c.b16 %v779, %v776
    %v948 = vpack.c.b16 %v783, %v780
    %v949 = vpack.c.b16 %v784, %v781
    %v950 = vpack.c.b16 %v785, %v782
    %v951 = vpack.c.b16 %v789, %v786
    %v952 = vpack.c.b16 %v790, %v787
    %v953 = vpack.c.b16 %v791, %v788
    %v954 = vpack.c.b16 %v795, %v792
    %v955 = vpack.c.b16 %v796, %v793
    %v956 = vpack.c.b16 %v797, %v794
    %v957 = vpack.c.b16 %v801, %v798
    %v958 = vpack.c.b16 %v802, %v799
    %v959 = vpack.c.b16 %v803, %v800
    %v960 = vpack.c.b16 %v807, %v804
    %v961 = vpack.c.b16 %v808, %v805
    %v962 = vpack.c.b16 %v809, %v806
    %v963 = vpack.c.b16 %v813, %v810
    %v964 = vpack.c.b16 %v814, %v811
    %v965 = vpack.c.b16 %v815, %v812
    %v966 = vpack.c.b16 %v819, %v816
    %v967 = vpack.c.b16 %v820, %v817
    %v968 = vpack.c.b16 %v821, %v818
    %v969 = vpack.c.b16 %v825, %v822
    %v970 = vpack.c.b16 %v826, %v823
    %v971 = vpack.c.b16 %v827, %v824
    %1116 = vmatprep.subr.bf16.mxu0 %v829
    %1117 = vmatpush1.bf16.msra.mxu0 %v828
    %1118 = vmatprep.subr.bf16.mxu0 %v832
    %1119 = vmatpush1.bf16.msra.mxu0 %v831
    %1120 = vmatprep.subr.bf16.mxu0 %v835
    %1121 = vmatpush1.bf16.msra.mxu0 %v834
    %1122 = vmatprep.subr.bf16.mxu0 %v838
    %1123 = vmatpush1.bf16.msra.mxu0 %v837
    %1124 = vmatprep.subr.bf16.mxu0 %v841
    %1125 = vmatpush1.bf16.msra.mxu0 %v840
    %1126 = vmatprep.subr.bf16.mxu0 %v844
    %1127 = vmatpush1.bf16.msra.mxu0 %v843
    %1128 = vmatprep.subr.bf16.mxu0 %v847
    %1129 = vmatpush1.bf16.msra.mxu0 %v846
    %1130 = vmatprep.subr.bf16.mxu0 %v850
    %1131 = vmatpush1.bf16.msra.mxu0 %v849
    %1132 = vmatprep.subr.bf16.mxu0 %v853
    %1133 = vmatpush1.bf16.msra.mxu0 %v852
    %1134 = vmatprep.subr.bf16.mxu0 %v856
    %1135 = vmatpush1.bf16.msra.mxu0 %v855
    %1136 = vmatprep.subr.bf16.mxu0 %v859
    %1137 = vmatpush1.bf16.msra.mxu0 %v858
    %1138 = vmatprep.subr.bf16.mxu0 %v862
    %1139 = vmatpush1.bf16.msra.mxu0 %v861
    %1140 = vmatprep.subr.bf16.mxu0 %v865
    %1141 = vmatpush1.bf16.msra.mxu0 %v864
    %1142 = vmatprep.subr.bf16.mxu0 %v868
    %1143 = vmatpush1.bf16.msra.mxu0 %v867
    %1144 = vmatprep.subr.bf16.mxu0 %v871
    %1145 = vmatpush1.bf16.msra.mxu0 %v870
    %1146 = vmatprep.subr.bf16.mxu0 %v874
    %1147 = vmatpush1.bf16.msra.mxu0 %v873
    %1148 = vmatprep.mubr.bf16.mxu0 %v134
    %1149 = vmatmul.mubr.bf16.gmra.mrb[0].mxu0 %v133
    %v1150 = vpop.f32.mrb[0].mxu0
    %v1151 = vadd.f32 %v336, %v1150
    %v1152 = vpop.f32.mrb[0].mxu0
    %v1153 = vadd.f32 %v340, %v1152
    %v1154 = vpop.f32.mrb[0].mxu0
    %v1155 = vpop.f32.mrb[0].mxu0
    %1156 = vdwg.mxu0
    %1157 = vmatprep.subr.bf16.mxu0 %v877
    %1158 = vmatpush1.bf16.msra.mxu0 %v876
    %1159 = vmatprep.subr.bf16.mxu0 %v880
    %1160 = vmatpush1.bf16.msra.mxu0 %v879
    %1161 = vmatprep.subr.bf16.mxu0 %v883
    %1162 = vmatpush1.bf16.msra.mxu0 %v882
    %1163 = vmatprep.subr.bf16.mxu0 %v886
    %1164 = vmatpush1.bf16.msra.mxu0 %v885
    %1165 = vmatprep.subr.bf16.mxu0 %v889
    %1166 = vmatpush1.bf16.msra.mxu0 %v888
    %1167 = vmatprep.subr.bf16.mxu0 %v892
    %1168 = vmatpush1.bf16.msra.mxu0 %v891
    %1169 = vmatprep.subr.bf16.mxu0 %v895
    %1170 = vmatpush1.bf16.msra.mxu0 %v894
    %1171 = vmatprep.subr.bf16.mxu0 %v898
    %1172 = vmatpush1.bf16.msra.mxu0 %v897
    %1173 = vmatprep.subr.bf16.mxu0 %v901
    %1174 = vmatpush1.bf16.msra.mxu0 %v900
    %1175 = vmatprep.subr.bf16.mxu0 %v904
    %1176 = vmatpush1.bf16.msra.mxu0 %v903
    %1177 = vmatprep.subr.bf16.mxu0 %v907
    %1178 = vmatpush1.bf16.msra.mxu0 %v906
    %1179 = vmatprep.subr.bf16.mxu0 %v910
    %1180 = vmatpush1.bf16.msra.mxu0 %v909
    %1181 = vmatprep.subr.bf16.mxu0 %v913
    %1182 = vmatpush1.bf16.msra.mxu0 %v912
    %1183 = vmatprep.subr.bf16.mxu0 %v916
    %1184 = vmatpush1.bf16.msra.mxu0 %v915
    %1185 = vmatprep.subr.bf16.mxu0 %v919
    %1186 = vmatpush1.bf16.msra.mxu0 %v918
    %1187 = vmatprep.subr.bf16.mxu0 %v922
    %1188 = vmatpush1.bf16.msra.mxu0 %v921
    %1189 = vmatprep.mubr.bf16.mxu0 %v136
    %1190 = vmatmul.mubr.bf16.gmra.mrb[0].mxu0 %v135
    %v1191 = vpop.f32.mrb[0].mxu0
    %v1192 = vadd.f32 %v1151, %v1191
    %v1193 = vpop.f32.mrb[0].mxu0
    %v1194 = vadd.f32 %v1153, %v1193
    %v1195 = vpop.f32.mrb[0].mxu0
    %v1196 = vpop.f32.mrb[0].mxu0
    %1197 = vdwg.mxu0
    %1198 = vmatprep.subr.bf16.mxu0 %v925
    %1199 = vmatpush1.bf16.msra.mxu0 %v924
    %1200 = vmatprep.subr.bf16.mxu0 %v928
    %1201 = vmatpush1.bf16.msra.mxu0 %v927
    %1202 = vmatprep.subr.bf16.mxu0 %v931
    %1203 = vmatpush1.bf16.msra.mxu0 %v930
    %1204 = vmatprep.subr.bf16.mxu0 %v934
    %1205 = vmatpush1.bf16.msra.mxu0 %v933
    %1206 = vmatprep.subr.bf16.mxu0 %v937
    %1207 = vmatpush1.bf16.msra.mxu0 %v936
    %1208 = vmatprep.subr.bf16.mxu0 %v940
    %1209 = vmatpush1.bf16.msra.mxu0 %v939
    %1210 = vmatprep.subr.bf16.mxu0 %v943
    %1211 = vmatpush1.bf16.msra.mxu0 %v942
    %1212 = vmatprep.subr.bf16.mxu0 %v946
    %1213 = vmatpush1.bf16.msra.mxu0 %v945
    %1214 = vmatprep.subr.bf16.mxu0 %v949
    %1215 = vmatpush1.bf16.msra.mxu0 %v948
    %1216 = vmatprep.subr.bf16.mxu0 %v952
    %1217 = vmatpush1.bf16.msra.mxu0 %v951
    %1218 = vmatprep.subr.bf16.mxu0 %v955
    %1219 = vmatpush1.bf16.msra.mxu0 %v954
    %1220 = vmatprep.subr.bf16.mxu0 %v958
    %1221 = vmatpush1.bf16.msra.mxu0 %v957
    %1222 = vmatprep.subr.bf16.mxu0 %v961
    %1223 = vmatpush1.bf16.msra.mxu0 %v960
    %1224 = vmatprep.subr.bf16.mxu0 %v964
    %1225 = vmatpush1.bf16.msra.mxu0 %v963
    %1226 = vmatprep.subr.bf16.mxu0 %v967
    %1227 = vmatpush1.bf16.msra.mxu0 %v966
    %1228 = vmatprep.subr.bf16.mxu0 %v970
    %1229 = vmatpush1.bf16.msra.mxu0 %v969
    %1230 = vmatprep.mubr.bf16.mxu0 %v138
    %1231 = vmatmul.mubr.bf16.gmra.mrb[0].mxu0 %v137
    %v1232 = vpop.f32.mrb[0].mxu0
    %v1233 = vadd.f32 %v1192, %v1232
    %v1234 = vpop.f32.mrb[0].mxu0
    %v1235 = vadd.f32 %v1194, %v1234
    %v1236 = vpop.f32.mrb[0].mxu0
    %v1237 = vpop.f32.mrb[0].mxu0
    %1238 = vdwg.mxu0
    %1239 = vmatprep.subr.bf16.mxu0 0
    %1240 = vmatpush1.bf16.msra.mxu0 %v830
    %1241 = vmatprep.subr.bf16.mxu0 0
    %1242 = vmatpush1.bf16.msra.mxu0 %v833
    %1243 = vmatprep.subr.bf16.mxu0 0
    %1244 = vmatpush1.bf16.msra.mxu0 %v836
    %1245 = vmatprep.subr.bf16.mxu0 0
    %1246 = vmatpush1.bf16.msra.mxu0 %v839
    %1247 = vmatprep.subr.bf16.mxu0 0
    %1248 = vmatpush1.bf16.msra.mxu0 %v842
    %1249 = vmatprep.subr.bf16.mxu0 0
    %1250 = vmatpush1.bf16.msra.mxu0 %v845
    %1251 = vmatprep.subr.bf16.mxu0 0
    %1252 = vmatpush1.bf16.msra.mxu0 %v848
    %1253 = vmatprep.subr.bf16.mxu0 0
    %1254 = vmatpush1.bf16.msra.mxu0 %v851
    %1255 = vmatprep.subr.bf16.mxu0 0
    %1256 = vmatpush1.bf16.msra.mxu0 %v854
    %1257 = vmatprep.subr.bf16.mxu0 0
    %1258 = vmatpush1.bf16.msra.mxu0 %v857
    %1259 = vmatprep.subr.bf16.mxu0 0
    %1260 = vmatpush1.bf16.msra.mxu0 %v860
    %1261 = vmatprep.subr.bf16.mxu0 0
    %1262 = vmatpush1.bf16.msra.mxu0 %v863
    %1263 = vmatprep.subr.bf16.mxu0 0
    %1264 = vmatpush1.bf16.msra.mxu0 %v866
    %1265 = vmatprep.subr.bf16.mxu0 0
    %1266 = vmatpush1.bf16.msra.mxu0 %v869
    %1267 = vmatprep.subr.bf16.mxu0 0
    %1268 = vmatpush1.bf16.msra.mxu0 %v872
    %1269 = vmatprep.subr.bf16.mxu0 0
    %1270 = vmatpush1.bf16.msra.mxu0 %v875
    %1271 = vmatprep.mubr.bf16.mxu0 %v134
    %1272 = vmatmul.mubr.bf16.gmra.mrb[0].mxu0 %v133
    %v1273 = vpop.f32.mrb[0].mxu0
    %v1274 = vadd.f32 %v344, %v1273
    %v1275 = vpop.f32.mrb[0].mxu0
    %v1276 = vpop.f32.mrb[0].mxu0
    %v1277 = vpop.f32.mrb[0].mxu0
    %1278 = vdwg.mxu0
    %1279 = vmatprep.subr.bf16.mxu0 0
    %1280 = vmatpush1.bf16.msra.mxu0 %v878
    %1281 = vmatprep.subr.bf16.mxu0 0
    %1282 = vmatpush1.bf16.msra.mxu0 %v881
    %1283 = vmatprep.subr.bf16.mxu0 0
    %1284 = vmatpush1.bf16.msra.mxu0 %v884
    %1285 = vmatprep.subr.bf16.mxu0 0
    %1286 = vmatpush1.bf16.msra.mxu0 %v887
    %1287 = vmatprep.subr.bf16.mxu0 0
    %1288 = vmatpush1.bf16.msra.mxu0 %v890
    %1289 = vmatprep.subr.bf16.mxu0 0
    %1290 = vmatpush1.bf16.msra.mxu0 %v893
    %1291 = vmatprep.subr.bf16.mxu0 0
    %1292 = vmatpush1.bf16.msra.mxu0 %v896
    %1293 = vmatprep.subr.bf16.mxu0 0
    %1294 = vmatpush1.bf16.msra.mxu0 %v899
    %1295 = vmatprep.subr.bf16.mxu0 0
    %1296 = vmatpush1.bf16.msra.mxu0 %v902
    %1297 = vmatprep.subr.bf16.mxu0 0
    %1298 = vmatpush1.bf16.msra.mxu0 %v905
    %1299 = vmatprep.subr.bf16.mxu0 0
    %1300 = vmatpush1.bf16.msra.mxu0 %v908
    %1301 = vmatprep.subr.bf16.mxu0 0
    %1302 = vmatpush1.bf16.msra.mxu0 %v911
    %1303 = vmatprep.subr.bf16.mxu0 0
    %1304 = vmatpush1.bf16.msra.mxu0 %v914
    %1305 = vmatprep.subr.bf16.mxu0 0
    %1306 = vmatpush1.bf16.msra.mxu0 %v917
    %1307 = vmatprep.subr.bf16.mxu0 0
    %1308 = vmatpush1.bf16.msra.mxu0 %v920
    %1309 = vmatprep.subr.bf16.mxu0 0
    %1310 = vmatpush1.bf16.msra.mxu0 %v923
    %1311 = vmatprep.mubr.bf16.mxu0 %v136
    %1312 = vmatmul.mubr.bf16.gmra.mrb[0].mxu0 %v135
    %v1313 = vpop.f32.mrb[0].mxu0
    %v1314 = vadd.f32 %v1274, %v1313
    %v1315 = vpop.f32.mrb[0].mxu0
    %v1316 = vpop.f32.mrb[0].mxu0
    %v1317 = vpop.f32.mrb[0].mxu0
    %1318 = vdwg.mxu0
    %1319 = vmatprep.subr.bf16.mxu0 0
    %1320 = vmatpush1.bf16.msra.mxu0 %v926
    %1321 = vmatprep.subr.bf16.mxu0 0
    %1322 = vmatpush1.bf16.msra.mxu0 %v929
    %1323 = vmatprep.subr.bf16.mxu0 0
    %1324 = vmatpush1.bf16.msra.mxu0 %v932
    %1325 = vmatprep.subr.bf16.mxu0 0
    %1326 = vmatpush1.bf16.msra.mxu0 %v935
    %1327 = vmatprep.subr.bf16.mxu0 0
    %1328 = vmatpush1.bf16.msra.mxu0 %v938
    %1329 = vmatprep.subr.bf16.mxu0 0
    %1330 = vmatpush1.bf16.msra.mxu0 %v941
    %1331 = vmatprep.subr.bf16.mxu0 0
    %1332 = vmatpush1.bf16.msra.mxu0 %v944
    %1333 = vmatprep.subr.bf16.mxu0 0
    %1334 = vmatpush1.bf16.msra.mxu0 %v947
    %1335 = vmatprep.subr.bf16.mxu0 0
    %1336 = vmatpush1.bf16.msra.mxu0 %v950
    %1337 = vmatprep.subr.bf16.mxu0 0
    %1338 = vmatpush1.bf16.msra.mxu0 %v953
    %1339 = vmatprep.subr.bf16.mxu0 0
    %1340 = vmatpush1.bf16.msra.mxu0 %v956
    %1341 = vmatprep.subr.bf16.mxu0 0
    %1342 = vmatpush1.bf16.msra.mxu0 %v959
    %1343 = vmatprep.subr.bf16.mxu0 0
    %1344 = vmatpush1.bf16.msra.mxu0 %v962
    %1345 = vmatprep.subr.bf16.mxu0 0
    %1346 = vmatpush1.bf16.msra.mxu0 %v965
    %1347 = vmatprep.subr.bf16.mxu0 0
    %1348 = vmatpush1.bf16.msra.mxu0 %v968
    %1349 = vmatprep.subr.bf16.mxu0 0
    %1350 = vmatpush1.bf16.msra.mxu0 %v971
    %1351 = vmatprep.mubr.bf16.mxu0 %v138
    %1352 = vmatmul.mubr.bf16.gmra.mrb[0].mxu0 %v137
    %v1353 = vpop.f32.mrb[0].mxu0
    %v1354 = vadd.f32 %v1314, %v1353
    %v1355 = vpop.f32.mrb[0].mxu0
    %v1356 = vpop.f32.mrb[0].mxu0
    %v1357 = vpop.f32.mrb[0].mxu0
    %1358 = vdwg.mxu0
    %v1359 = vmax.f32 %v1233, 0.0
    %v1360 = vmax.f32 %v1235, 0.0
    %v1361 = vmax.f32 %v1354, 0.0
    %v1362 = vpack.c.bf16 %v1359, %v1359
    %v1363 = vpack.c.bf16 %v1360, %v1360
    %v1364 = vpack.c.bf16 %v1361, %v1361
    %v1365 = vld [vmem:[#allocation4] sm:$0xf]
    %v1366 = vld [vmem:[#allocation4 + $0x4] sm:$0xf]
    %v1367 = vld [vmem:[#allocation4 + $0x8] sm:$0xf]
    %v1368 = vld [vmem:[#allocation4 + $0xc] sm:$0xf]
    %v1369 = vld [vmem:[#allocation4 + $0x10] sm:$0xf]
    %v1370 = vld [vmem:[#allocation4 + $0x14] sm:$0xf]
    %v1371 = vld [vmem:[#allocation4 + $0x18] sm:$0xf]
    %v1372 = vld [vmem:[#allocation4 + $0x1c] sm:$0xf]
    %v1373 = vld [vmem:[#allocation4 + $0x20] sm:$0xf]
    %v1374 = vld [vmem:[#allocation4 + $0x24] sm:$0xf]
    %v1375 = vld [vmem:[#allocation4 + $0x28] sm:$0xf]
    %v1376 = vld [vmem:[#allocation4 + $0x2c] sm:$0xf]
    %v1377 = vld [vmem:[#allocation4 + $0x30] sm:$0xf]
    %v1378 = vld [vmem:[#allocation4 + $0x34] sm:$0xf]
    %v1379 = vld [vmem:[#allocation4 + $0x38] sm:$0xf]
    %v1380 = vld [vmem:[#allocation4 + $0x3c] sm:$0xf]
    %v1381 = vld [vmem:[#allocation4 + $0x40] sm:$0xf]
    %v1382 = vld [vmem:[#allocation4 + $0x44] sm:$0xf]
    %v1383 = vld [vmem:[#allocation4 + $0x48] sm:$0xf]
    %v1384 = vld [vmem:[#allocation4 + $0x4c] sm:$0xf]
    %v1385 = vld [vmem:[#allocation4 + $0x50] sm:$0xf]
    %v1386 = vld [vmem:[#allocation4 + $0x54] sm:$0xf]
    %v1387 = vld [vmem:[#allocation4 + $0x58] sm:$0xf]
    %v1388 = vld [vmem:[#allocation4 + $0x5c] sm:$0xf]
    %v1389 = vld [vmem:[#allocation4 + $0x60] sm:$0xf]
    %v1390 = vld [vmem:[#allocation4 + $0x64] sm:$0xf]
    %v1391 = vld [vmem:[#allocation4 + $0x68] sm:$0xf]
    %v1392 = vld [vmem:[#allocation4 + $0x6c] sm:$0xf]
    %v1393 = vld [vmem:[#allocation4 + $0x70] sm:$0xf]
    %v1394 = vld [vmem:[#allocation4 + $0x74] sm:$0xf]
    %v1395 = vld [vmem:[#allocation4 + $0x78] sm:$0xf]
    %v1396 = vld [vmem:[#allocation4 + $0x7c] sm:$0xf]
    %v1397 = vld [vmem:[#allocation4 + $0x80] sm:$0xf]
    %v1398 = vld [vmem:[#allocation4 + $0x84] sm:$0xf]
    %v1399 = vld [vmem:[#allocation4 + $0x88] sm:$0xf]
    %v1400 = vld [vmem:[#allocation4 + $0x8c] sm:$0xf]
    %v1401 = vld [vmem:[#allocation4 + $0x90] sm:$0xf]
    %v1402 = vld [vmem:[#allocation4 + $0x94] sm:$0xf]
    %v1403 = vld [vmem:[#allocation4 + $0x98] sm:$0xf]
    %v1404 = vld [vmem:[#allocation4 + $0x9c] sm:$0xf]
    %v1405 = vld [vmem:[#allocation4 + $0xa0] sm:$0xf]
    %v1406 = vld [vmem:[#allocation4 + $0xa4] sm:$0xf]
    %v1407 = vld [vmem:[#allocation4 + $0xa8] sm:$0xf]
    %v1408 = vld [vmem:[#allocation4 + $0xac] sm:$0xf]
    %v1409 = vld [vmem:[#allocation4 + $0xb0] sm:$0xf]
    %v1410 = vld [vmem:[#allocation4 + $0xb4] sm:$0xf]
    %v1411 = vld [vmem:[#allocation4 + $0xb8] sm:$0xf]
    %v1412 = vld [vmem:[#allocation4 + $0xbc] sm:$0xf]
    %v1413 = vld [vmem:[%s7 + $0x1] ss:$0 sm:$0xff]
    %v1462 = vunpack.c.l.b16 %v1365
    %v1463 = vunpack.c.l.b16 %v1366
    %v1464 = vunpack.c.l.b16 %v1367
    %v1465 = vunpack.c.l.b16 %v1368
    %v1466 = vunpack.c.l.b16 %v1369
    %v1467 = vunpack.c.l.b16 %v1370
    %v1468 = vunpack.c.l.b16 %v1371
    %v1469 = vunpack.c.l.b16 %v1372
    %v1470 = vunpack.c.l.b16 %v1373
    %v1471 = vunpack.c.l.b16 %v1374
    %v1472 = vunpack.c.l.b16 %v1375
    %v1473 = vunpack.c.l.b16 %v1376
    %v1474 = vunpack.c.l.b16 %v1377
    %v1475 = vunpack.c.l.b16 %v1378
    %v1476 = vunpack.c.l.b16 %v1379
    %v1477 = vunpack.c.l.b16 %v1380
    %v1478 = vunpack.c.l.b16 %v1381
    %v1479 = vunpack.c.l.b16 %v1382
    %v1480 = vunpack.c.l.b16 %v1383
    %v1481 = vunpack.c.l.b16 %v1384
    %v1482 = vunpack.c.l.b16 %v1385
    %v1483 = vunpack.c.l.b16 %v1386
    %v1484 = vunpack.c.l.b16 %v1387
    %v1485 = vunpack.c.l.b16 %v1388
    %v1486 = vunpack.c.l.b16 %v1389
    %v1487 = vunpack.c.l.b16 %v1390
    %v1488 = vunpack.c.l.b16 %v1391
    %v1489 = vunpack.c.l.b16 %v1392
    %v1490 = vunpack.c.l.b16 %v1393
    %v1491 = vunpack.c.l.b16 %v1394
    %v1492 = vunpack.c.l.b16 %v1395
    %v1493 = vunpack.c.l.b16 %v1396
    %v1494 = vunpack.c.l.b16 %v1397
    %v1495 = vunpack.c.l.b16 %v1398
    %v1496 = vunpack.c.l.b16 %v1399
    %v1497 = vunpack.c.l.b16 %v1400
    %v1498 = vunpack.c.l.b16 %v1401
    %v1499 = vunpack.c.l.b16 %v1402
    %v1500 = vunpack.c.l.b16 %v1403
    %v1501 = vunpack.c.l.b16 %v1404
    %v1502 = vunpack.c.l.b16 %v1405
    %v1503 = vunpack.c.l.b16 %v1406
    %v1504 = vunpack.c.l.b16 %v1407
    %v1505 = vunpack.c.l.b16 %v1408
    %v1506 = vunpack.c.l.b16 %v1409
    %v1507 = vunpack.c.l.b16 %v1410
    %v1508 = vunpack.c.l.b16 %v1411
    %v1509 = vunpack.c.l.b16 %v1412
    %v1510 = vpack.c.b16 %v1463, %v1462
    %v1511 = vpack.c.b16 %v1465, %v1464
    %v1512 = vpack.c.b16 %v1467, %v1466
    %v1513 = vpack.c.b16 %v1469, %v1468
    %v1514 = vpack.c.b16 %v1471, %v1470
    %v1515 = vpack.c.b16 %v1473, %v1472
    %v1516 = vpack.c.b16 %v1475, %v1474
    %v1517 = vpack.c.b16 %v1477, %v1476
    %v1518 = vpack.c.b16 %v1479, %v1478
    %v1519 = vpack.c.b16 %v1481, %v1480
    %v1520 = vpack.c.b16 %v1483, %v1482
    %v1521 = vpack.c.b16 %v1485, %v1484
    %v1522 = vpack.c.b16 %v1487, %v1486
    %v1523 = vpack.c.b16 %v1489, %v1488
    %v1524 = vpack.c.b16 %v1491, %v1490
    %v1525 = vpack.c.b16 %v1493, %v1492
    %v1526 = vpack.c.b16 %v1495, %v1494
    %v1527 = vpack.c.b16 %v1497, %v1496
    %v1528 = vpack.c.b16 %v1499, %v1498
    %v1529 = vpack.c.b16 %v1501, %v1500
    %v1530 = vpack.c.b16 %v1503, %v1502
    %v1531 = vpack.c.b16 %v1505, %v1504
    %v1532 = vpack.c.b16 %v1507, %v1506
    %v1533 = vpack.c.b16 %v1509, %v1508
    %1558 = vmatprep.subr.bf16.mxu0 0
    %1559 = vmatpush1.bf16.msra.mxu0 %v1510
    %1560 = vmatprep.subr.bf16.mxu0 0
    %1561 = vmatpush1.bf16.msra.mxu0 %v1511
    %1562 = vmatprep.subr.bf16.mxu0 0
    %1563 = vmatpush1.bf16.msra.mxu0 %v1512
    %1564 = vmatprep.subr.bf16.mxu0 0
    %1565 = vmatpush1.bf16.msra.mxu0 %v1513
    %1566 = vmatprep.subr.bf16.mxu0 0
    %1567 = vmatpush1.bf16.msra.mxu0 %v1514
    %1568 = vmatprep.subr.bf16.mxu0 0
    %1569 = vmatpush1.bf16.msra.mxu0 %v1515
    %1570 = vmatprep.subr.bf16.mxu0 0
    %1571 = vmatpush1.bf16.msra.mxu0 %v1516
    %1572 = vmatprep.subr.bf16.mxu0 0
    %1573 = vmatpush1.bf16.msra.mxu0 %v1517
    %1574 = vmatprep.subr.bf16.mxu0 0
    %1575 = vmatpush1.bf16.msra.mxu0 %v1518
    %1576 = vmatprep.subr.bf16.mxu0 0
    %1577 = vmatpush1.bf16.msra.mxu0 %v1519
    %1578 = vmatprep.subr.bf16.mxu0 0
    %1579 = vmatpush1.bf16.msra.mxu0 %v1520
    %1580 = vmatprep.subr.bf16.mxu0 0
    %1581 = vmatpush1.bf16.msra.mxu0 %v1521
    %1582 = vmatprep.subr.bf16.mxu0 0
    %1583 = vmatpush1.bf16.msra.mxu0 %v1522
    %1584 = vmatprep.subr.bf16.mxu0 0
    %1585 = vmatpush1.bf16.msra.mxu0 %v1523
    %1586 = vmatprep.subr.bf16.mxu0 0
    %1587 = vmatpush1.bf16.msra.mxu0 %v1524
    %1588 = vmatprep.subr.bf16.mxu0 0
    %1589 = vmatpush1.bf16.msra.mxu0 %v1525
    %1590 = vmatprep.mubr.bf16.mxu0 %v1363
    %1591 = vmatmul.mubr.bf16.gmra.mrb[0].mxu0 %v1362
    %v1592 = vpop.f32.mrb[0].mxu0
    %v1593 = vadd.f32 %v1413, %v1592
    %v1594 = vpop.f32.mrb[0].mxu0
    %v1595 = vpop.f32.mrb[0].mxu0
    %v1596 = vpop.f32.mrb[0].mxu0
    %1597 = vdwg.mxu0
    %1598 = vmatprep.subr.bf16.mxu0 0
    %1599 = vmatpush1.bf16.msra.mxu0 %v1526
    %1600 = vmatprep.subr.bf16.mxu0 0
    %1601 = vmatpush1.bf16.msra.mxu0 %v1527
    %1602 = vmatprep.subr.bf16.mxu0 0
    %1603 = vmatpush1.bf16.msra.mxu0 %v1528
    %1604 = vmatprep.subr.bf16.mxu0 0
    %1605 = vmatpush1.bf16.msra.mxu0 %v1529
    %1606 = vmatprep.subr.bf16.mxu0 0
    %1607 = vmatpush1.bf16.msra.mxu0 %v1530
    %1608 = vmatprep.subr.bf16.mxu0 0
    %1609 = vmatpush1.bf16.msra.mxu0 %v1531
    %1610 = vmatprep.subr.bf16.mxu0 0
    %1611 = vmatpush1.bf16.msra.mxu0 %v1532
    %1612 = vmatprep.subr.bf16.mxu0 0
    %1613 = vmatpush1.bf16.msra.mxu0 %v1533
    %1614 = vmatprep.subr.bf16.mxu0 0
    %1615 = vmatpush1.bf16.msra.mxu0 0
    %1616 = vmatprep.subr.bf16.mxu0 0
    %1617 = vmatpush1.bf16.msra.mxu0 0
    %1618 = vmatprep.subr.bf16.mxu0 0
    %1619 = vmatpush1.bf16.msra.mxu0 0
    %1620 = vmatprep.subr.bf16.mxu0 0
    %1621 = vmatpush1.bf16.msra.mxu0 0
    %1622 = vmatprep.subr.bf16.mxu0 0
    %1623 = vmatpush1.bf16.msra.mxu0 0
    %1624 = vmatprep.subr.bf16.mxu0 0
    %1625 = vmatpush1.bf16.msra.mxu0 0
    %1626 = vmatprep.subr.bf16.mxu0 0
    %1627 = vmatpush1.bf16.msra.mxu0 0
    %1628 = vmatprep.subr.bf16.mxu0 0
    %1629 = vmatpush1.bf16.msra.mxu0 0
    %1630 = vmatprep.mubr.bf16.mxu0 0
    %1631 = vmatmul.mubr.bf16.gmra.mrb[0].mxu0 %v1364
    %v1632 = vpop.f32.mrb[0].mxu0
    %v1633 = vadd.f32 %v1593, %v1632
    %v1634 = vpop.f32.mrb[0].mxu0
    %v1635 = vpop.f32.mrb[0].mxu0
    %v1636 = vpop.f32.mrb[0].mxu0
    %1637 = vdwg.mxu0
    %v1638 = vmax.f32 %v1633, 0.0
    %v1639 = vpack.c.bf16 %v1638, %v1638
    %v1640 = vld [vmem:[%s3] sm:$0xf]
    %v1641 = vld [vmem:[%s3 + $0x4] sm:$0xf]
    %v1642 = vld [vmem:[%s3 + $0x8] sm:$0xf]
    %v1643 = vld [vmem:[%s3 + $0xc] sm:$0xf]
    %v1644 = vld [vmem:[%s3 + $0x10] sm:$0xf]
    %v1645 = vld [vmem:[%s3 + $0x14] sm:$0xf]
    %v1646 = vld [vmem:[%s3 + $0x18] sm:$0xf]
    %v1647 = vld [vmem:[%s3 + $0x1c] sm:$0xf]
    %v1648 = vld [vmem:[%s3 + $0x20] sm:$0xf]
    %v1649 = vld [vmem:[%s3 + $0x24] sm:$0xf]
    %v1650 = vld [vmem:[%s3 + $0x28] sm:$0xf]
    %v1651 = vld [vmem:[%s3 + $0x2c] sm:$0xf]
    %v1652 = vld [vmem:[%s3 + $0x30] sm:$0xf]
    %v1653 = vld [vmem:[%s3 + $0x34] sm:$0xf]
    %v1654 = vld [vmem:[%s3 + $0x38] sm:$0xf]
    %v1655 = vld [vmem:[%s3 + $0x3c] sm:$0xf]
    %v1656 = vld [vmem:[%s7 + $0x2] ss:$0 sm:$0xff]
    %v1673 = vunpack.c.l.b16 %v1640
    %v1674 = vunpack.c.l.b16 %v1641
    %v1675 = vunpack.c.l.b16 %v1642
    %v1676 = vunpack.c.l.b16 %v1643
    %v1677 = vunpack.c.l.b16 %v1644
    %v1678 = vunpack.c.l.b16 %v1645
    %v1679 = vunpack.c.l.b16 %v1646
    %v1680 = vunpack.c.l.b16 %v1647
    %v1681 = vunpack.c.l.b16 %v1648
    %v1682 = vunpack.c.l.b16 %v1649
    %v1683 = vunpack.c.l.b16 %v1650
    %v1684 = vunpack.c.l.b16 %v1651
    %v1685 = vunpack.c.l.b16 %v1652
    %v1686 = vunpack.c.l.b16 %v1653
    %v1687 = vunpack.c.l.b16 %v1654
    %v1688 = vunpack.c.l.b16 %v1655
    %v1689 = vpack.c.b16 %v1674, %v1673
    %v1690 = vpack.c.b16 %v1676, %v1675
    %v1691 = vpack.c.b16 %v1678, %v1677
    %v1692 = vpack.c.b16 %v1680, %v1679
    %v1693 = vpack.c.b16 %v1682, %v1681
    %v1694 = vpack.c.b16 %v1684, %v1683
    %v1695 = vpack.c.b16 %v1686, %v1685
    %v1696 = vpack.c.b16 %v1688, %v1687
    %1705 = vmatprep.subr.bf16.mxu0 0
    %1706 = vmatpush1.bf16.msra.mxu0 %v1689
    %1707 = vmatprep.subr.bf16.mxu0 0
    %1708 = vmatpush1.bf16.msra.mxu0 %v1690
    %1709 = vmatprep.subr.bf16.mxu0 0
    %1710 = vmatpush1.bf16.msra.mxu0 %v1691
    %1711 = vmatprep.subr.bf16.mxu0 0
    %1712 = vmatpush1.bf16.msra.mxu0 %v1692
    %1713 = vmatprep.subr.bf16.mxu0 0
    %1714 = vmatpush1.bf16.msra.mxu0 %v1693
    %1715 = vmatprep.subr.bf16.mxu0 0
    %1716 = vmatpush1.bf16.msra.mxu0 %v1694
    %1717 = vmatprep.subr.bf16.mxu0 0
    %1718 = vmatpush1.bf16.msra.mxu0 %v1695
    %1719 = vmatprep.subr.bf16.mxu0 0
    %1720 = vmatpush1.bf16.msra.mxu0 %v1696
    %1721 = vmatprep.subr.bf16.mxu0 0
    %1722 = vmatpush1.bf16.msra.mxu0 0
    %1723 = vmatprep.subr.bf16.mxu0 0
    %1724 = vmatpush1.bf16.msra.mxu0 0
    %1725 = vmatprep.subr.bf16.mxu0 0
    %1726 = vmatpush1.bf16.msra.mxu0 0
    %1727 = vmatprep.subr.bf16.mxu0 0
    %1728 = vmatpush1.bf16.msra.mxu0 0
    %1729 = vmatprep.subr.bf16.mxu0 0
    %1730 = vmatpush1.bf16.msra.mxu0 0
    %1731 = vmatprep.subr.bf16.mxu0 0
    %1732 = vmatpush1.bf16.msra.mxu0 0
    %1733 = vmatprep.subr.bf16.mxu0 0
    %1734 = vmatpush1.bf16.msra.mxu0 0
    %1735 = vmatprep.subr.bf16.mxu0 0
    %1736 = vmatpush1.bf16.msra.mxu0 0
    %1737 = vmatprep.mubr.bf16.mxu0 0
    %1738 = vmatmul.mubr.bf16.gmra.mrb[0].mxu0 %v1639
    %v1739 = vpop.f32.mrb[0].mxu0
    %v1740 = vadd.f32 %v1656, %v1739
    %v1741 = vpop.f32.mrb[0].mxu0
    %v1742 = vpop.f32.mrb[0].mxu0
    %v1743 = vpop.f32.mrb[0].mxu0
    %1744 = vdwg.mxu0
    %v1745 = vmax.f32 %v1740, 0.0
    %v1746 = vpack.c.bf16 %v1745, %v1745
    %v1747 = vld [vmem:[#allocation6] sm:$0xf]
    %v1748 = vld [vmem:[#allocation6 + $0x4] sm:$0xf]
    %v1749 = vld [vmem:[#allocation6 + $0x8] sm:$0xf]
    %v1750 = vld [vmem:[#allocation6 + $0xc] sm:$0xf]
    %v1751 = vld [vmem:[#allocation6 + $0x10] sm:$0xf]
    %v1752 = vld [vmem:[#allocation6 + $0x14] sm:$0xf]
    %v1753 = vld [vmem:[#allocation6 + $0x18] sm:$0xf]
    %v1754 = vld [vmem:[#allocation6 + $0x1c] sm:$0xf]
    %v1755 = vld [vmem:[#allocation6 + $0x20] sm:$0xf]
    %v1756 = vld [vmem:[#allocation6 + $0x24] sm:$0xf]
    %v1757 = vld [vmem:[#allocation6 + $0x28] sm:$0xf]
    %v1758 = vld [vmem:[#allocation6 + $0x2c] sm:$0xf]
    %v1759 = vld [vmem:[#allocation6 + $0x30] sm:$0xf]
    %v1760 = vld [vmem:[#allocation6 + $0x34] sm:$0xf]
    %v1761 = vld [vmem:[#allocation6 + $0x38] sm:$0xf]
    %v1762 = vld [vmem:[#allocation6 + $0x3c] sm:$0xf]
    %v1763 = vld [vmem:[%s7 + $0x3] ss:$0 sm:$0xff]
    %v1780 = vunpack.c.l.b16 %v1747
    %v1781 = vunpack.c.l.b16 %v1748
    %v1782 = vunpack.c.l.b16 %v1749
    %v1783 = vunpack.c.l.b16 %v1750
    %v1784 = vunpack.c.l.b16 %v1751
    %v1785 = vunpack.c.l.b16 %v1752
    %v1786 = vunpack.c.l.b16 %v1753
    %v1787 = vunpack.c.l.b16 %v1754
    %v1788 = vunpack.c.l.b16 %v1755
    %v1789 = vunpack.c.l.b16 %v1756
    %v1790 = vunpack.c.l.b16 %v1757
    %v1791 = vunpack.c.l.b16 %v1758
    %v1792 = vunpack.c.l.b16 %v1759
    %v1793 = vunpack.c.l.b16 %v1760
    %v1794 = vunpack.c.l.b16 %v1761
    %v1795 = vunpack.c.l.b16 %v1762
    %v1796 = vpack.c.b16 %v1781, %v1780
    %v1797 = vpack.c.b16 %v1783, %v1782
    %v1798 = vpack.c.b16 %v1785, %v1784
    %v1799 = vpack.c.b16 %v1787, %v1786
    %v1800 = vpack.c.b16 %v1789, %v1788
    %v1801 = vpack.c.b16 %v1791, %v1790
    %v1802 = vpack.c.b16 %v1793, %v1792
    %v1803 = vpack.c.b16 %v1795, %v1794
    %1812 = vmatprep.subr.bf16.mxu0 0
    %1813 = vmatpush1.bf16.msra.mxu0 %v1796
    %1814 = vmatprep.subr.bf16.mxu0 0
    %1815 = vmatpush1.bf16.msra.mxu0 %v1797
    %1816 = vmatprep.subr.bf16.mxu0 0
    %1817 = vmatpush1.bf16.msra.mxu0 %v1798
    %1818 = vmatprep.subr.bf16.mxu0 0
    %1819 = vmatpush1.bf16.msra.mxu0 %v1799
    %1820 = vmatprep.subr.bf16.mxu0 0
    %1821 = vmatpush1.bf16.msra.mxu0 %v1800
    %1822 = vmatprep.subr.bf16.mxu0 0
    %1823 = vmatpush1.bf16.msra.mxu0 %v1801
    %1824 = vmatprep.subr.bf16.mxu0 0
    %1825 = vmatpush1.bf16.msra.mxu0 %v1802
    %1826 = vmatprep.subr.bf16.mxu0 0
    %1827 = vmatpush1.bf16.msra.mxu0 %v1803
    %1828 = vmatprep.subr.bf16.mxu0 0
    %1829 = vmatpush1.bf16.msra.mxu0 0
    %1830 = vmatprep.subr.bf16.mxu0 0
    %1831 = vmatpush1.bf16.msra.mxu0 0
    %1832 = vmatprep.subr.bf16.mxu0 0
    %1833 = vmatpush1.bf16.msra.mxu0 0
    %1834 = vmatprep.subr.bf16.mxu0 0
    %1835 = vmatpush1.bf16.msra.mxu0 0
    %1836 = vmatprep.subr.bf16.mxu0 0
    %1837 = vmatpush1.bf16.msra.mxu0 0
    %1838 = vmatprep.subr.bf16.mxu0 0
    %1839 = vmatpush1.bf16.msra.mxu0 0
    %1840 = vmatprep.subr.bf16.mxu0 0
    %1841 = vmatpush1.bf16.msra.mxu0 0
    %1842 = vmatprep.subr.bf16.mxu0 0
    %1843 = vmatpush1.bf16.msra.mxu0 0
    %1844 = vmatprep.mubr.bf16.mxu0 0
    %1845 = vmatmul.mubr.bf16.gmra.mrb[0].mxu0 %v1746
    %v1846 = vpop.f32.mrb[0].mxu0
    %v1847 = vadd.f32 %v1763, %v1846
    %v1848 = vpop.f32.mrb[0].mxu0
    %v1849 = vpop.f32.mrb[0].mxu0
    %v1850 = vpop.f32.mrb[0].mxu0
    %1851 = vdwg.mxu0
    %v1852 = vmax.f32 %v1847, 0.0
    %v1853 = vpack.c.bf16 %v1852, %v1852
    %v1854 = vld [vmem:[#allocation7] sm:$0xff]
    %v1855 = vld [vmem:[#allocation7 + $0x8] sm:$0xf]
    %v1856 = vld [vmem:[#allocation7 + $0xc] sm:$0xff]
    %v1857 = vld [vmem:[#allocation7 + $0x14] sm:$0xf]
    %v1858 = vld [vmem:[#allocation7 + $0x18] sm:$0xff]
    %v1859 = vld [vmem:[#allocation7 + $0x20] sm:$0xf]
    %v1860 = vld [vmem:[#allocation7 + $0x24] sm:$0xff]
    %v1861 = vld [vmem:[#allocation7 + $0x2c] sm:$0xf]
    %v1862 = vld [vmem:[#allocation7 + $0x30] sm:$0xff]
    %v1863 = vld [vmem:[#allocation7 + $0x38] sm:$0xf]
    %v1864 = vld [vmem:[#allocation7 + $0x3c] sm:$0xff]
    %v1865 = vld [vmem:[#allocation7 + $0x44] sm:$0xf]
    %v1866 = vld [vmem:[#allocation7 + $0x48] sm:$0xff]
    %v1867 = vld [vmem:[#allocation7 + $0x50] sm:$0xf]
    %v1868 = vld [vmem:[#allocation7 + $0x54] sm:$0xff]
    %v1869 = vld [vmem:[#allocation7 + $0x5c] sm:$0xf]
    %v1870 = vld [vmem:[#allocation7 + $0x60] sm:$0xff]
    %v1871 = vld [vmem:[#allocation7 + $0x68] sm:$0xf]
    %v1872 = vld [vmem:[#allocation7 + $0x6c] sm:$0xff]
    %v1873 = vld [vmem:[#allocation7 + $0x74] sm:$0xf]
    %v1874 = vld [vmem:[#allocation7 + $0x78] sm:$0xff]
    %v1875 = vld [vmem:[#allocation7 + $0x80] sm:$0xf]
    %v1876 = vld [vmem:[#allocation7 + $0x84] sm:$0xff]
    %v1877 = vld [vmem:[#allocation7 + $0x8c] sm:$0xf]
    %v1878 = vld [vmem:[#allocation7 + $0x90] sm:$0xff]
    %v1879 = vld [vmem:[#allocation7 + $0x98] sm:$0xf]
    %v1880 = vld [vmem:[#allocation7 + $0x9c] sm:$0xff]
    %v1881 = vld [vmem:[#allocation7 + $0xa4] sm:$0xf]
    %v1882 = vld [vmem:[#allocation7 + $0xa8] sm:$0xff]
    %v1883 = vld [vmem:[#allocation7 + $0xb0] sm:$0xf]
    %v1884 = vld [vmem:[#allocation7 + $0xb4] sm:$0xff]
    %v1885 = vld [vmem:[#allocation7 + $0xbc] sm:$0xf]
    %s1886 = scalar_lea.vmem %s7, 4
    %v1887 = vld [vmem:[%s1886] ss:$8 sm:$0x7]
    %v1889 = vlaneseq
    %v1890 = vshrl.u32 %v1889, 7
    %v1891 = vsub.s32 0, %v1890
    %v1892 = vrot.slane %v1887, %v1891
    %v1893 = vlaneseq
    %v1894 = vshrl.u32 %v1893, 7
    %v1895 = vsub.s32 1, %v1894
    %v1896 = vrot.slane %v1887, %v1895
    %v1897 = vlaneseq
    %v1898 = vshrl.u32 %v1897, 7
    %v1899 = vsub.s32 2, %v1898
    %v1900 = vrot.slane %v1887, %v1899
    %v1936 = vunpack.c.l.b16 %v1854
    %v1937 = vunpack.c.h.b16 %v1854
    %v1938 = vunpack.c.l.b16 %v1855
    %v1939 = vunpack.c.l.b16 %v1856
    %v1940 = vunpack.c.h.b16 %v1856
    %v1941 = vunpack.c.l.b16 %v1857
    %v1942 = vunpack.c.l.b16 %v1858
    %v1943 = vunpack.c.h.b16 %v1858
    %v1944 = vunpack.c.l.b16 %v1859
    %v1945 = vunpack.c.l.b16 %v1860
    %v1946 = vunpack.c.h.b16 %v1860
    %v1947 = vunpack.c.l.b16 %v1861
    %v1948 = vunpack.c.l.b16 %v1862
    %v1949 = vunpack.c.h.b16 %v1862
    %v1950 = vunpack.c.l.b16 %v1863
    %v1951 = vunpack.c.l.b16 %v1864
    %v1952 = vunpack.c.h.b16 %v1864
    %v1953 = vunpack.c.l.b16 %v1865
    %v1954 = vunpack.c.l.b16 %v1866
    %v1955 = vunpack.c.h.b16 %v1866
    %v1956 = vunpack.c.l.b16 %v1867
    %v1957 = vunpack.c.l.b16 %v1868
    %v1958 = vunpack.c.h.b16 %v1868
    %v1959 = vunpack.c.l.b16 %v1869
    %v1960 = vunpack.c.l.b16 %v1870
    %v1961 = vunpack.c.h.b16 %v1870
    %v1962 = vunpack.c.l.b16 %v1871
    %v1963 = vunpack.c.l.b16 %v1872
    %v1964 = vunpack.c.h.b16 %v1872
    %v1965 = vunpack.c.l.b16 %v1873
    %v1966 = vunpack.c.l.b16 %v1874
    %v1967 = vunpack.c.h.b16 %v1874
    %v1968 = vunpack.c.l.b16 %v1875
    %v1969 = vunpack.c.l.b16 %v1876
    %v1970 = vunpack.c.h.b16 %v1876
    %v1971 = vunpack.c.l.b16 %v1877
    %v1972 = vunpack.c.l.b16 %v1878
    %v1973 = vunpack.c.h.b16 %v1878
    %v1974 = vunpack.c.l.b16 %v1879
    %v1975 = vunpack.c.l.b16 %v1880
    %v1976 = vunpack.c.h.b16 %v1880
    %v1977 = vunpack.c.l.b16 %v1881
    %v1978 = vunpack.c.l.b16 %v1882
    %v1979 = vunpack.c.h.b16 %v1882
    %v1980 = vunpack.c.l.b16 %v1883
    %v1981 = vunpack.c.l.b16 %v1884
    %v1982 = vunpack.c.h.b16 %v1884
    %v1983 = vunpack.c.l.b16 %v1885
    %v1984 = vpack.c.b16 %v1939, %v1936
    %v1985 = vpack.c.b16 %v1940, %v1937
    %v1986 = vpack.c.b16 %v1941, %v1938
    %v1987 = vpack.c.b16 %v1945, %v1942
    %v1988 = vpack.c.b16 %v1946, %v1943
    %v1989 = vpack.c.b16 %v1947, %v1944
    %v1990 = vpack.c.b16 %v1951, %v1948
    %v1991 = vpack.c.b16 %v1952, %v1949
    %v1992 = vpack.c.b16 %v1953, %v1950
    %v1993 = vpack.c.b16 %v1957, %v1954
    %v1994 = vpack.c.b16 %v1958, %v1955
    %v1995 = vpack.c.b16 %v1959, %v1956
    %v1996 = vpack.c.b16 %v1963, %v1960
    %v1997 = vpack.c.b16 %v1964, %v1961
    %v1998 = vpack.c.b16 %v1965, %v1962
    %v1999 = vpack.c.b16 %v1969, %v1966
    %v2000 = vpack.c.b16 %v1970, %v1967
    %v2001 = vpack.c.b16 %v1971, %v1968
    %v2002 = vpack.c.b16 %v1975, %v1972
    %v2003 = vpack.c.b16 %v1976, %v1973
    %v2004 = vpack.c.b16 %v1977, %v1974
    %v2005 = vpack.c.b16 %v1981, %v1978
    %v2006 = vpack.c.b16 %v1982, %v1979
    %v2007 = vpack.c.b16 %v1983, %v1980
    %2032 = vmatprep.subr.bf16.mxu0 %v1985
    %2033 = vmatpush1.bf16.msra.mxu0 %v1984
    %2034 = vmatprep.subr.bf16.mxu0 %v1988
    %2035 = vmatpush1.bf16.msra.mxu0 %v1987
    %2036 = vmatprep.subr.bf16.mxu0 %v1991
    %2037 = vmatpush1.bf16.msra.mxu0 %v1990
    %2038 = vmatprep.subr.bf16.mxu0 %v1994
    %2039 = vmatpush1.bf16.msra.mxu0 %v1993
    %2040 = vmatprep.subr.bf16.mxu0 %v1997
    %2041 = vmatpush1.bf16.msra.mxu0 %v1996
    %2042 = vmatprep.subr.bf16.mxu0 %v2000
    %2043 = vmatpush1.bf16.msra.mxu0 %v1999
    %2044 = vmatprep.subr.bf16.mxu0 %v2003
    %2045 = vmatpush1.bf16.msra.mxu0 %v2002
    %2046 = vmatprep.subr.bf16.mxu0 %v2006
    %2047 = vmatpush1.bf16.msra.mxu0 %v2005
    %2048 = vmatprep.subr.bf16.mxu0 0
    %2049 = vmatpush1.bf16.msra.mxu0 0
    %2050 = vmatprep.subr.bf16.mxu0 0
    %2051 = vmatpush1.bf16.msra.mxu0 0
    %2052 = vmatprep.subr.bf16.mxu0 0
    %2053 = vmatpush1.bf16.msra.mxu0 0
    %2054 = vmatprep.subr.bf16.mxu0 0
    %2055 = vmatpush1.bf16.msra.mxu0 0
    %2056 = vmatprep.subr.bf16.mxu0 0
    %2057 = vmatpush1.bf16.msra.mxu0 0
    %2058 = vmatprep.subr.bf16.mxu0 0
    %2059 = vmatpush1.bf16.msra.mxu0 0
    %2060 = vmatprep.subr.bf16.mxu0 0
    %2061 = vmatpush1.bf16.msra.mxu0 0
    %2062 = vmatprep.subr.bf16.mxu0 0
    %2063 = vmatpush1.bf16.msra.mxu0 0
    %2064 = vmatprep.mubr.bf16.mxu0 0
    %2065 = vmatmul.mubr.bf16.gmra.mrb[0].mxu0 %v1853
    %v2066 = vpop.f32.mrb[0].mxu0
    %v2067 = vadd.f32 %v1892, %v2066
    %v2068 = vpop.f32.mrb[0].mxu0
    %v2069 = vadd.f32 %v1896, %v2068
    %v2070 = vpop.f32.mrb[0].mxu0
    %v2071 = vpop.f32.mrb[0].mxu0
    %2072 = vdwg.mxu0
    %2073 = vmatprep.subr.bf16.mxu0 0
    %2074 = vmatpush1.bf16.msra.mxu0 %v1986
    %2075 = vmatprep.subr.bf16.mxu0 0
    %2076 = vmatpush1.bf16.msra.mxu0 %v1989
    %2077 = vmatprep.subr.bf16.mxu0 0
    %2078 = vmatpush1.bf16.msra.mxu0 %v1992
    %2079 = vmatprep.subr.bf16.mxu0 0
    %2080 = vmatpush1.bf16.msra.mxu0 %v1995
    %2081 = vmatprep.subr.bf16.mxu0 0
    %2082 = vmatpush1.bf16.msra.mxu0 %v1998
    %2083 = vmatprep.subr.bf16.mxu0 0
    %2084 = vmatpush1.bf16.msra.mxu0 %v2001
    %2085 = vmatprep.subr.bf16.mxu0 0
    %2086 = vmatpush1.bf16.msra.mxu0 %v2004
    %2087 = vmatprep.subr.bf16.mxu0 0
    %2088 = vmatpush1.bf16.msra.mxu0 %v2007
    %2089 = vmatprep.subr.bf16.mxu0 0
    %2090 = vmatpush1.bf16.msra.mxu0 0
    %2091 = vmatprep.subr.bf16.mxu0 0
    %2092 = vmatpush1.bf16.msra.mxu0 0
    %2093 = vmatprep.subr.bf16.mxu0 0
    %2094 = vmatpush1.bf16.msra.mxu0 0
    %2095 = vmatprep.subr.bf16.mxu0 0
    %2096 = vmatpush1.bf16.msra.mxu0 0
    %2097 = vmatprep.subr.bf16.mxu0 0
    %2098 = vmatpush1.bf16.msra.mxu0 0
    %2099 = vmatprep.subr.bf16.mxu0 0
    %2100 = vmatpush1.bf16.msra.mxu0 0
    %2101 = vmatprep.subr.bf16.mxu0 0
    %2102 = vmatpush1.bf16.msra.mxu0 0
    %2103 = vmatprep.subr.bf16.mxu0 0
    %2104 = vmatpush1.bf16.msra.mxu0 0
    %2105 = vmatprep.mubr.bf16.mxu0 0
    %2106 = vmatmul.mubr.bf16.gmra.mrb[0].mxu0 %v1853
    %v2107 = vpop.f32.mrb[0].mxu0
    %v2108 = vadd.f32 %v1900, %v2107
    %v2109 = vpop.f32.mrb[0].mxu0
    %v2110 = vpop.f32.mrb[0].mxu0
    %v2111 = vpop.f32.mrb[0].mxu0
    %2112 = vdwg.mxu0
    %v2113 = vmax.f32 %v2067, 0.0
    %v2114 = vmax.f32 %v2069, 0.0
    %v2115 = vmax.f32 %v2108, 0.0
    %v2116 = vpack.c.bf16 %v2113, %v2113
    %v2117 = vpack.c.bf16 %v2114, %v2114
    %v2118 = vpack.c.bf16 %v2115, %v2115
    %v2119 = vld [vmem:[#allocation9] sm:$0xff]
    %v2120 = vld [vmem:[#allocation9 + $0x8] sm:$0xff]
    %v2121 = vld [vmem:[#allocation9 + $0x10] sm:$0xff]
    %v2122 = vld [vmem:[#allocation9 + $0x18] sm:$0xff]
    %v2123 = vld [vmem:[#allocation9 + $0x20] sm:$0xff]
    %v2124 = vld [vmem:[#allocation9 + $0x28] sm:$0xff]
    %v2125 = vld [vmem:[#allocation9 + $0x30] sm:$0xff]
    %v2126 = vld [vmem:[#allocation9 + $0x38] sm:$0xff]
    %v2127 = vld [vmem:[#allocation9 + $0x40] sm:$0xff]
    %v2128 = vld [vmem:[#allocation9 + $0x48] sm:$0xff]
    %v2129 = vld [vmem:[#allocation9 + $0x50] sm:$0xff]
    %v2130 = vld [vmem:[#allocation9 + $0x58] sm:$0xff]
    %v2131 = vld [vmem:[#allocation9 + $0x60] sm:$0xff]
    %v2132 = vld [vmem:[#allocation9 + $0x68] sm:$0xff]
    %v2133 = vld [vmem:[#allocation9 + $0x70] sm:$0xff]
    %v2134 = vld [vmem:[#allocation9 + $0x78] sm:$0xff]
    %v2135 = vld [vmem:[#allocation9 + $0x80] sm:$0xff]
    %v2136 = vld [vmem:[#allocation9 + $0x88] sm:$0xff]
    %v2137 = vld [vmem:[#allocation9 + $0x90] sm:$0xff]
    %v2138 = vld [vmem:[#allocation9 + $0x98] sm:$0xff]
    %v2139 = vld [vmem:[#allocation9 + $0xa0] sm:$0xff]
    %v2140 = vld [vmem:[#allocation9 + $0xa8] sm:$0xff]
    %v2141 = vld [vmem:[#allocation9 + $0xb0] sm:$0xff]
    %v2142 = vld [vmem:[#allocation9 + $0xb8] sm:$0xff]
    %v2143 = vld [vmem:[#allocation9 + $0xc0] sm:$0xff]
    %v2144 = vld [vmem:[#allocation9 + $0xc8] sm:$0xff]
    %v2145 = vld [vmem:[#allocation9 + $0xd0] sm:$0xff]
    %v2146 = vld [vmem:[#allocation9 + $0xd8] sm:$0xff]
    %v2147 = vld [vmem:[#allocation9 + $0xe0] sm:$0xff]
    %v2148 = vld [vmem:[#allocation9 + $0xe8] sm:$0xff]
    %v2149 = vld [vmem:[#allocation9 + $0xf0] sm:$0xff]
    %v2150 = vld [vmem:[#allocation9 + $0xf8] sm:$0xff]
    %v2151 = vld [vmem:[#allocation9 + $0x100] sm:$0xff]
    %v2152 = vld [vmem:[#allocation9 + $0x108] sm:$0xff]
    %v2153 = vld [vmem:[#allocation9 + $0x110] sm:$0xff]
    %v2154 = vld [vmem:[#allocation9 + $0x118] sm:$0xff]
    %v2155 = vld [vmem:[#allocation9 + $0x120] sm:$0xff]
    %v2156 = vld [vmem:[#allocation9 + $0x128] sm:$0xff]
    %v2157 = vld [vmem:[#allocation9 + $0x130] sm:$0xff]
    %v2158 = vld [vmem:[#allocation9 + $0x138] sm:$0xff]
    %v2159 = vld [vmem:[#allocation9 + $0x140] sm:$0xff]
    %v2160 = vld [vmem:[#allocation9 + $0x148] sm:$0xff]
    %v2161 = vld [vmem:[#allocation9 + $0x150] sm:$0xff]
    %v2162 = vld [vmem:[#allocation9 + $0x158] sm:$0xff]
    %v2163 = vld [vmem:[#allocation9 + $0x160] sm:$0xff]
    %v2164 = vld [vmem:[#allocation9 + $0x168] sm:$0xff]
    %v2165 = vld [vmem:[#allocation9 + $0x170] sm:$0xff]
    %v2166 = vld [vmem:[#allocation9 + $0x178] sm:$0xff]
    %v2167 = vld [vmem:[#allocation9 + $0x180] sm:$0xff]
    %v2168 = vld [vmem:[#allocation9 + $0x188] sm:$0xff]
    %v2169 = vld [vmem:[#allocation9 + $0x190] sm:$0xff]
    %v2170 = vld [vmem:[#allocation9 + $0x198] sm:$0xff]
    %v2171 = vld [vmem:[#allocation9 + $0x1a0] sm:$0xff]
    %v2172 = vld [vmem:[#allocation9 + $0x1a8] sm:$0xff]
    %v2173 = vld [vmem:[#allocation9 + $0x1b0] sm:$0xff]
    %v2174 = vld [vmem:[#allocation9 + $0x1b8] sm:$0xff]
    %v2175 = vld [vmem:[#allocation9 + $0x1c0] sm:$0xff]
    %v2176 = vld [vmem:[#allocation9 + $0x1c8] sm:$0xff]
    %v2177 = vld [vmem:[#allocation9 + $0x1d0] sm:$0xff]
    %v2178 = vld [vmem:[#allocation9 + $0x1d8] sm:$0xff]
    %v2179 = vld [vmem:[#allocation9 + $0x1e0] sm:$0xff]
    %v2180 = vld [vmem:[#allocation9 + $0x1e8] sm:$0xff]
    %v2181 = vld [vmem:[#allocation9 + $0x1f0] sm:$0xff]
    %v2182 = vld [vmem:[#allocation9 + $0x1f8] sm:$0xff]
    %v2183 = vld [vmem:[#allocation9 + $0x200] sm:$0xff]
    %v2184 = vld [vmem:[#allocation9 + $0x208] sm:$0xff]
    %v2185 = vld [vmem:[#allocation9 + $0x210] sm:$0xff]
    %v2186 = vld [vmem:[#allocation9 + $0x218] sm:$0xff]
    %v2187 = vld [vmem:[#allocation9 + $0x220] sm:$0xff]
    %v2188 = vld [vmem:[#allocation9 + $0x228] sm:$0xff]
    %v2189 = vld [vmem:[#allocation9 + $0x230] sm:$0xff]
    %v2190 = vld [vmem:[#allocation9 + $0x238] sm:$0xff]
    %v2191 = vld [vmem:[#allocation9 + $0x240] sm:$0xff]
    %v2192 = vld [vmem:[#allocation9 + $0x248] sm:$0xff]
    %v2193 = vld [vmem:[#allocation9 + $0x250] sm:$0xff]
    %v2194 = vld [vmem:[#allocation9 + $0x258] sm:$0xff]
    %v2195 = vld [vmem:[#allocation9 + $0x260] sm:$0xff]
    %v2196 = vld [vmem:[#allocation9 + $0x268] sm:$0xff]
    %v2197 = vld [vmem:[#allocation9 + $0x270] sm:$0xff]
    %v2198 = vld [vmem:[#allocation9 + $0x278] sm:$0xff]
    %v2199 = vld [vmem:[#allocation9 + $0x280] sm:$0xff]
    %v2200 = vld [vmem:[#allocation9 + $0x288] sm:$0xff]
    %v2201 = vld [vmem:[#allocation9 + $0x290] sm:$0xff]
    %v2202 = vld [vmem:[#allocation9 + $0x298] sm:$0xff]
    %v2203 = vld [vmem:[#allocation9 + $0x2a0] sm:$0xff]
    %v2204 = vld [vmem:[#allocation9 + $0x2a8] sm:$0xff]
    %v2205 = vld [vmem:[#allocation9 + $0x2b0] sm:$0xff]
    %v2206 = vld [vmem:[#allocation9 + $0x2b8] sm:$0xff]
    %v2207 = vld [vmem:[#allocation9 + $0x2c0] sm:$0xff]
    %v2208 = vld [vmem:[#allocation9 + $0x2c8] sm:$0xff]
    %v2209 = vld [vmem:[#allocation9 + $0x2d0] sm:$0xff]
    %v2210 = vld [vmem:[#allocation9 + $0x2d8] sm:$0xff]
    %v2211 = vld [vmem:[#allocation9 + $0x2e0] sm:$0xff]
    %v2212 = vld [vmem:[#allocation9 + $0x2e8] sm:$0xff]
    %v2213 = vld [vmem:[#allocation9 + $0x2f0] sm:$0xff]
    %v2214 = vld [vmem:[#allocation9 + $0x2f8] sm:$0xff]
    %s2215 = scalar_lea.vmem %s7, 5
    %v2216 = vld [vmem:[%s2215] ss:$8 sm:$0xf]
    %v2218 = vlaneseq
    %v2219 = vshrl.u32 %v2218, 7
    %v2220 = vsub.s32 0, %v2219
    %v2221 = vrot.slane %v2216, %v2220
    %v2222 = vlaneseq
    %v2223 = vshrl.u32 %v2222, 7
    %v2224 = vsub.s32 1, %v2223
    %v2225 = vrot.slane %v2216, %v2224
    %v2226 = vlaneseq
    %v2227 = vshrl.u32 %v2226, 7
    %v2228 = vsub.s32 2, %v2227
    %v2229 = vrot.slane %v2216, %v2228
    %v2230 = vlaneseq
    %v2231 = vshrl.u32 %v2230, 7
    %v2232 = vsub.s32 3, %v2231
    %v2233 = vrot.slane %v2216, %v2232
    %v2334 = vunpack.c.l.b16 %v2119
    %v2335 = vunpack.c.h.b16 %v2119
    %v2336 = vunpack.c.l.b16 %v2120
    %v2337 = vunpack.c.h.b16 %v2120
    %v2338 = vunpack.c.l.b16 %v2121
    %v2339 = vunpack.c.h.b16 %v2121
    %v2340 = vunpack.c.l.b16 %v2122
    %v2341 = vunpack.c.h.b16 %v2122
    %v2342 = vunpack.c.l.b16 %v2123
    %v2343 = vunpack.c.h.b16 %v2123
    %v2344 = vunpack.c.l.b16 %v2124
    %v2345 = vunpack.c.h.b16 %v2124
    %v2346 = vunpack.c.l.b16 %v2125
    %v2347 = vunpack.c.h.b16 %v2125
    %v2348 = vunpack.c.l.b16 %v2126
    %v2349 = vunpack.c.h.b16 %v2126
    %v2350 = vunpack.c.l.b16 %v2127
    %v2351 = vunpack.c.h.b16 %v2127
    %v2352 = vunpack.c.l.b16 %v2128
    %v2353 = vunpack.c.h.b16 %v2128
    %v2354 = vunpack.c.l.b16 %v2129
    %v2355 = vunpack.c.h.b16 %v2129
    %v2356 = vunpack.c.l.b16 %v2130
    %v2357 = vunpack.c.h.b16 %v2130
    %v2358 = vunpack.c.l.b16 %v2131
    %v2359 = vunpack.c.h.b16 %v2131
    %v2360 = vunpack.c.l.b16 %v2132
    %v2361 = vunpack.c.h.b16 %v2132
    %v2362 = vunpack.c.l.b16 %v2133
    %v2363 = vunpack.c.h.b16 %v2133
    %v2364 = vunpack.c.l.b16 %v2134
    %v2365 = vunpack.c.h.b16 %v2134
    %v2366 = vunpack.c.l.b16 %v2135
    %v2367 = vunpack.c.h.b16 %v2135
    %v2368 = vunpack.c.l.b16 %v2136
    %v2369 = vunpack.c.h.b16 %v2136
    %v2370 = vunpack.c.l.b16 %v2137
    %v2371 = vunpack.c.h.b16 %v2137
    %v2372 = vunpack.c.l.b16 %v2138
    %v2373 = vunpack.c.h.b16 %v2138
    %v2374 = vunpack.c.l.b16 %v2139
    %v2375 = vunpack.c.h.b16 %v2139
    %v2376 = vunpack.c.l.b16 %v2140
    %v2377 = vunpack.c.h.b16 %v2140
    %v2378 = vunpack.c.l.b16 %v2141
    %v2379 = vunpack.c.h.b16 %v2141
    %v2380 = vunpack.c.l.b16 %v2142
    %v2381 = vunpack.c.h.b16 %v2142
    %v2382 = vunpack.c.l.b16 %v2143
    %v2383 = vunpack.c.h.b16 %v2143
    %v2384 = vunpack.c.l.b16 %v2144
    %v2385 = vunpack.c.h.b16 %v2144
    %v2386 = vunpack.c.l.b16 %v2145
    %v2387 = vunpack.c.h.b16 %v2145
    %v2388 = vunpack.c.l.b16 %v2146
    %v2389 = vunpack.c.h.b16 %v2146
    %v2390 = vunpack.c.l.b16 %v2147
    %v2391 = vunpack.c.h.b16 %v2147
    %v2392 = vunpack.c.l.b16 %v2148
    %v2393 = vunpack.c.h.b16 %v2148
    %v2394 = vunpack.c.l.b16 %v2149
    %v2395 = vunpack.c.h.b16 %v2149
    %v2396 = vunpack.c.l.b16 %v2150
    %v2397 = vunpack.c.h.b16 %v2150
    %v2398 = vunpack.c.l.b16 %v2151
    %v2399 = vunpack.c.h.b16 %v2151
    %v2400 = vunpack.c.l.b16 %v2152
    %v2401 = vunpack.c.h.b16 %v2152
    %v2402 = vunpack.c.l.b16 %v2153
    %v2403 = vunpack.c.h.b16 %v2153
    %v2404 = vunpack.c.l.b16 %v2154
    %v2405 = vunpack.c.h.b16 %v2154
    %v2406 = vunpack.c.l.b16 %v2155
    %v2407 = vunpack.c.h.b16 %v2155
    %v2408 = vunpack.c.l.b16 %v2156
    %v2409 = vunpack.c.h.b16 %v2156
    %v2410 = vunpack.c.l.b16 %v2157
    %v2411 = vunpack.c.h.b16 %v2157
    %v2412 = vunpack.c.l.b16 %v2158
    %v2413 = vunpack.c.h.b16 %v2158
    %v2414 = vunpack.c.l.b16 %v2159
    %v2415 = vunpack.c.h.b16 %v2159
    %v2416 = vunpack.c.l.b16 %v2160
    %v2417 = vunpack.c.h.b16 %v2160
    %v2418 = vunpack.c.l.b16 %v2161
    %v2419 = vunpack.c.h.b16 %v2161
    %v2420 = vunpack.c.l.b16 %v2162
    %v2421 = vunpack.c.h.b16 %v2162
    %v2422 = vunpack.c.l.b16 %v2163
    %v2423 = vunpack.c.h.b16 %v2163
    %v2424 = vunpack.c.l.b16 %v2164
    %v2425 = vunpack.c.h.b16 %v2164
    %v2426 = vunpack.c.l.b16 %v2165
    %v2427 = vunpack.c.h.b16 %v2165
    %v2428 = vunpack.c.l.b16 %v2166
    %v2429 = vunpack.c.h.b16 %v2166
    %v2430 = vunpack.c.l.b16 %v2167
    %v2431 = vunpack.c.h.b16 %v2167
    %v2432 = vunpack.c.l.b16 %v2168
    %v2433 = vunpack.c.h.b16 %v2168
    %v2434 = vunpack.c.l.b16 %v2169
    %v2435 = vunpack.c.h.b16 %v2169
    %v2436 = vunpack.c.l.b16 %v2170
    %v2437 = vunpack.c.h.b16 %v2170
    %v2438 = vunpack.c.l.b16 %v2171
    %v2439 = vunpack.c.h.b16 %v2171
    %v2440 = vunpack.c.l.b16 %v2172
    %v2441 = vunpack.c.h.b16 %v2172
    %v2442 = vunpack.c.l.b16 %v2173
    %v2443 = vunpack.c.h.b16 %v2173
    %v2444 = vunpack.c.l.b16 %v2174
    %v2445 = vunpack.c.h.b16 %v2174
    %v2446 = vunpack.c.l.b16 %v2175
    %v2447 = vunpack.c.h.b16 %v2175
    %v2448 = vunpack.c.l.b16 %v2176
    %v2449 = vunpack.c.h.b16 %v2176
    %v2450 = vunpack.c.l.b16 %v2177
    %v2451 = vunpack.c.h.b16 %v2177
    %v2452 = vunpack.c.l.b16 %v2178
    %v2453 = vunpack.c.h.b16 %v2178
    %v2454 = vunpack.c.l.b16 %v2179
    %v2455 = vunpack.c.h.b16 %v2179
    %v2456 = vunpack.c.l.b16 %v2180
    %v2457 = vunpack.c.h.b16 %v2180
    %v2458 = vunpack.c.l.b16 %v2181
    %v2459 = vunpack.c.h.b16 %v2181
    %v2460 = vunpack.c.l.b16 %v2182
    %v2461 = vunpack.c.h.b16 %v2182
    %v2462 = vunpack.c.l.b16 %v2183
    %v2463 = vunpack.c.h.b16 %v2183
    %v2464 = vunpack.c.l.b16 %v2184
    %v2465 = vunpack.c.h.b16 %v2184
    %v2466 = vunpack.c.l.b16 %v2185
    %v2467 = vunpack.c.h.b16 %v2185
    %v2468 = vunpack.c.l.b16 %v2186
    %v2469 = vunpack.c.h.b16 %v2186
    %v2470 = vunpack.c.l.b16 %v2187
    %v2471 = vunpack.c.h.b16 %v2187
    %v2472 = vunpack.c.l.b16 %v2188
    %v2473 = vunpack.c.h.b16 %v2188
    %v2474 = vunpack.c.l.b16 %v2189
    %v2475 = vunpack.c.h.b16 %v2189
    %v2476 = vunpack.c.l.b16 %v2190
    %v2477 = vunpack.c.h.b16 %v2190
    %v2478 = vunpack.c.l.b16 %v2191
    %v2479 = vunpack.c.h.b16 %v2191
    %v2480 = vunpack.c.l.b16 %v2192
    %v2481 = vunpack.c.h.b16 %v2192
    %v2482 = vunpack.c.l.b16 %v2193
    %v2483 = vunpack.c.h.b16 %v2193
    %v2484 = vunpack.c.l.b16 %v2194
    %v2485 = vunpack.c.h.b16 %v2194
    %v2486 = vunpack.c.l.b16 %v2195
    %v2487 = vunpack.c.h.b16 %v2195
    %v2488 = vunpack.c.l.b16 %v2196
    %v2489 = vunpack.c.h.b16 %v2196
    %v2490 = vunpack.c.l.b16 %v2197
    %v2491 = vunpack.c.h.b16 %v2197
    %v2492 = vunpack.c.l.b16 %v2198
    %v2493 = vunpack.c.h.b16 %v2198
    %v2494 = vunpack.c.l.b16 %v2199
    %v2495 = vunpack.c.h.b16 %v2199
    %v2496 = vunpack.c.l.b16 %v2200
    %v2497 = vunpack.c.h.b16 %v2200
    %v2498 = vunpack.c.l.b16 %v2201
    %v2499 = vunpack.c.h.b16 %v2201
    %v2500 = vunpack.c.l.b16 %v2202
    %v2501 = vunpack.c.h.b16 %v2202
    %v2502 = vunpack.c.l.b16 %v2203
    %v2503 = vunpack.c.h.b16 %v2203
    %v2504 = vunpack.c.l.b16 %v2204
    %v2505 = vunpack.c.h.b16 %v2204
    %v2506 = vunpack.c.l.b16 %v2205
    %v2507 = vunpack.c.h.b16 %v2205
    %v2508 = vunpack.c.l.b16 %v2206
    %v2509 = vunpack.c.h.b16 %v2206
    %v2510 = vunpack.c.l.b16 %v2207
    %v2511 = vunpack.c.h.b16 %v2207
    %v2512 = vunpack.c.l.b16 %v2208
    %v2513 = vunpack.c.h.b16 %v2208
    %v2514 = vunpack.c.l.b16 %v2209
    %v2515 = vunpack.c.h.b16 %v2209
    %v2516 = vunpack.c.l.b16 %v2210
    %v2517 = vunpack.c.h.b16 %v2210
    %v2518 = vunpack.c.l.b16 %v2211
    %v2519 = vunpack.c.h.b16 %v2211
    %v2520 = vunpack.c.l.b16 %v2212
    %v2521 = vunpack.c.h.b16 %v2212
    %v2522 = vunpack.c.l.b16 %v2213
    %v2523 = vunpack.c.h.b16 %v2213
    %v2524 = vunpack.c.l.b16 %v2214
    %v2525 = vunpack.c.h.b16 %v2214
    %v2526 = vpack.c.b16 %v2338, %v2334
    %v2527 = vpack.c.b16 %v2339, %v2335
    %v2528 = vpack.c.b16 %v2340, %v2336
    %v2529 = vpack.c.b16 %v2341, %v2337
    %v2530 = vpack.c.b16 %v2346, %v2342
    %v2531 = vpack.c.b16 %v2347, %v2343
    %v2532 = vpack.c.b16 %v2348, %v2344
    %v2533 = vpack.c.b16 %v2349, %v2345
    %v2534 = vpack.c.b16 %v2354, %v2350
    %v2535 = vpack.c.b16 %v2355, %v2351
    %v2536 = vpack.c.b16 %v2356, %v2352
    %v2537 = vpack.c.b16 %v2357, %v2353
    %v2538 = vpack.c.b16 %v2362, %v2358
    %v2539 = vpack.c.b16 %v2363, %v2359
    %v2540 = vpack.c.b16 %v2364, %v2360
    %v2541 = vpack.c.b16 %v2365, %v2361
    %v2542 = vpack.c.b16 %v2370, %v2366
    %v2543 = vpack.c.b16 %v2371, %v2367
    %v2544 = vpack.c.b16 %v2372, %v2368
    %v2545 = vpack.c.b16 %v2373, %v2369
    %v2546 = vpack.c.b16 %v2378, %v2374
    %v2547 = vpack.c.b16 %v2379, %v2375
    %v2548 = vpack.c.b16 %v2380, %v2376
    %v2549 = vpack.c.b16 %v2381, %v2377
    %v2550 = vpack.c.b16 %v2386, %v2382
    %v2551 = vpack.c.b16 %v2387, %v2383
    %v2552 = vpack.c.b16 %v2388, %v2384
    %v2553 = vpack.c.b16 %v2389, %v2385
    %v2554 = vpack.c.b16 %v2394, %v2390
    %v2555 = vpack.c.b16 %v2395, %v2391
    %v2556 = vpack.c.b16 %v2396, %v2392
    %v2557 = vpack.c.b16 %v2397, %v2393
    %v2558 = vpack.c.b16 %v2402, %v2398
    %v2559 = vpack.c.b16 %v2403, %v2399
    %v2560 = vpack.c.b16 %v2404, %v2400
    %v2561 = vpack.c.b16 %v2405, %v2401
    %v2562 = vpack.c.b16 %v2410, %v2406
    %v2563 = vpack.c.b16 %v2411, %v2407
    %v2564 = vpack.c.b16 %v2412, %v2408
    %v2565 = vpack.c.b16 %v2413, %v2409
    %v2566 = vpack.c.b16 %v2418, %v2414
    %v2567 = vpack.c.b16 %v2419, %v2415
    %v2568 = vpack.c.b16 %v2420, %v2416
    %v2569 = vpack.c.b16 %v2421, %v2417
    %v2570 = vpack.c.b16 %v2426, %v2422
    %v2571 = vpack.c.b16 %v2427, %v2423
    %v2572 = vpack.c.b16 %v2428, %v2424
    %v2573 = vpack.c.b16 %v2429, %v2425
    %v2574 = vpack.c.b16 %v2434, %v2430
    %v2575 = vpack.c.b16 %v2435, %v2431
    %v2576 = vpack.c.b16 %v2436, %v2432
    %v2577 = vpack.c.b16 %v2437, %v2433
    %v2578 = vpack.c.b16 %v2442, %v2438
    %v2579 = vpack.c.b16 %v2443, %v2439
    %v2580 = vpack.c.b16 %v2444, %v2440
    %v2581 = vpack.c.b16 %v2445, %v2441
    %v2582 = vpack.c.b16 %v2450, %v2446
    %v2583 = vpack.c.b16 %v2451, %v2447
    %v2584 = vpack.c.b16 %v2452, %v2448
    %v2585 = vpack.c.b16 %v2453, %v2449
    %v2586 = vpack.c.b16 %v2458, %v2454
    %v2587 = vpack.c.b16 %v2459, %v2455
    %v2588 = vpack.c.b16 %v2460, %v2456
    %v2589 = vpack.c.b16 %v2461, %v2457
    %v2590 = vpack.c.b16 %v2466, %v2462
    %v2591 = vpack.c.b16 %v2467, %v2463
    %v2592 = vpack.c.b16 %v2468, %v2464
    %v2593 = vpack.c.b16 %v2469, %v2465
    %v2594 = vpack.c.b16 %v2474, %v2470
    %v2595 = vpack.c.b16 %v2475, %v2471
    %v2596 = vpack.c.b16 %v2476, %v2472
    %v2597 = vpack.c.b16 %v2477, %v2473
    %v2598 = vpack.c.b16 %v2482, %v2478
    %v2599 = vpack.c.b16 %v2483, %v2479
    %v2600 = vpack.c.b16 %v2484, %v2480
    %v2601 = vpack.c.b16 %v2485, %v2481
    %v2602 = vpack.c.b16 %v2490, %v2486
    %v2603 = vpack.c.b16 %v2491, %v2487
    %v2604 = vpack.c.b16 %v2492, %v2488
    %v2605 = vpack.c.b16 %v2493, %v2489
    %v2606 = vpack.c.b16 %v2498, %v2494
    %v2607 = vpack.c.b16 %v2499, %v2495
    %v2608 = vpack.c.b16 %v2500, %v2496
    %v2609 = vpack.c.b16 %v2501, %v2497
    %v2610 = vpack.c.b16 %v2506, %v2502
    %v2611 = vpack.c.b16 %v2507, %v2503
    %v2612 = vpack.c.b16 %v2508, %v2504
    %v2613 = vpack.c.b16 %v2509, %v2505
    %v2614 = vpack.c.b16 %v2514, %v2510
    %v2615 = vpack.c.b16 %v2515, %v2511
    %v2616 = vpack.c.b16 %v2516, %v2512
    %v2617 = vpack.c.b16 %v2517, %v2513
    %v2618 = vpack.c.b16 %v2522, %v2518
    %v2619 = vpack.c.b16 %v2523, %v2519
    %v2620 = vpack.c.b16 %v2524, %v2520
    %v2621 = vpack.c.b16 %v2525, %v2521
    %2718 = vmatprep.subr.bf16.mxu0 %v2527
    %2719 = vmatpush1.bf16.msra.mxu0 %v2526
    %2720 = vmatprep.subr.bf16.mxu0 %v2531
    %2721 = vmatpush1.bf16.msra.mxu0 %v2530
    %2722 = vmatprep.subr.bf16.mxu0 %v2535
    %2723 = vmatpush1.bf16.msra.mxu0 %v2534
    %2724 = vmatprep.subr.bf16.mxu0 %v2539
    %2725 = vmatpush1.bf16.msra.mxu0 %v2538
    %2726 = vmatprep.subr.bf16.mxu0 %v2543
    %2727 = vmatpush1.bf16.msra.mxu0 %v2542
    %2728 = vmatprep.subr.bf16.mxu0 %v2547
    %2729 = vmatpush1.bf16.msra.mxu0 %v2546
    %2730 = vmatprep.subr.bf16.mxu0 %v2551
    %2731 = vmatpush1.bf16.msra.mxu0 %v2550
    %2732 = vmatprep.subr.bf16.mxu0 %v2555
    %2733 = vmatpush1.bf16.msra.mxu0 %v2554
    %2734 = vmatprep.subr.bf16.mxu0 %v2559
    %2735 = vmatpush1.bf16.msra.mxu0 %v2558
    %2736 = vmatprep.subr.bf16.mxu0 %v2563
    %2737 = vmatpush1.bf16.msra.mxu0 %v2562
    %2738 = vmatprep.subr.bf16.mxu0 %v2567
    %2739 = vmatpush1.bf16.msra.mxu0 %v2566
    %2740 = vmatprep.subr.bf16.mxu0 %v2571
    %2741 = vmatpush1.bf16.msra.mxu0 %v2570
    %2742 = vmatprep.subr.bf16.mxu0 %v2575
    %2743 = vmatpush1.bf16.msra.mxu0 %v2574
    %2744 = vmatprep.subr.bf16.mxu0 %v2579
    %2745 = vmatpush1.bf16.msra.mxu0 %v2578
    %2746 = vmatprep.subr.bf16.mxu0 %v2583
    %2747 = vmatpush1.bf16.msra.mxu0 %v2582
    %2748 = vmatprep.subr.bf16.mxu0 %v2587
    %2749 = vmatpush1.bf16.msra.mxu0 %v2586
    %2750 = vmatprep.mubr.bf16.mxu0 %v2117
    %2751 = vmatmul.mubr.bf16.gmra.mrb[0].mxu0 %v2116
    %v2752 = vpop.f32.mrb[0].mxu0
    %v2753 = vadd.f32 %v2221, %v2752
    %v2754 = vpop.f32.mrb[0].mxu0
    %v2755 = vadd.f32 %v2225, %v2754
    %v2756 = vpop.f32.mrb[0].mxu0
    %v2757 = vpop.f32.mrb[0].mxu0
    %2758 = vdwg.mxu0
    %2759 = vmatprep.subr.bf16.mxu0 %v2591
    %2760 = vmatpush1.bf16.msra.mxu0 %v2590
    %2761 = vmatprep.subr.bf16.mxu0 %v2595
    %2762 = vmatpush1.bf16.msra.mxu0 %v2594
    %2763 = vmatprep.subr.bf16.mxu0 %v2599
    %2764 = vmatpush1.bf16.msra.mxu0 %v2598
    %2765 = vmatprep.subr.bf16.mxu0 %v2603
    %2766 = vmatpush1.bf16.msra.mxu0 %v2602
    %2767 = vmatprep.subr.bf16.mxu0 %v2607
    %2768 = vmatpush1.bf16.msra.mxu0 %v2606
    %2769 = vmatprep.subr.bf16.mxu0 %v2611
    %2770 = vmatpush1.bf16.msra.mxu0 %v2610
    %2771 = vmatprep.subr.bf16.mxu0 %v2615
    %2772 = vmatpush1.bf16.msra.mxu0 %v2614
    %2773 = vmatprep.subr.bf16.mxu0 %v2619
    %2774 = vmatpush1.bf16.msra.mxu0 %v2618
    %2775 = vmatprep.subr.bf16.mxu0 0
    %2776 = vmatpush1.bf16.msra.mxu0 0
    %2777 = vmatprep.subr.bf16.mxu0 0
    %2778 = vmatpush1.bf16.msra.mxu0 0
    %2779 = vmatprep.subr.bf16.mxu0 0
    %2780 = vmatpush1.bf16.msra.mxu0 0
    %2781 = vmatprep.subr.bf16.mxu0 0
    %2782 = vmatpush1.bf16.msra.mxu0 0
    %2783 = vmatprep.subr.bf16.mxu0 0
    %2784 = vmatpush1.bf16.msra.mxu0 0
    %2785 = vmatprep.subr.bf16.mxu0 0
    %2786 = vmatpush1.bf16.msra.mxu0 0
    %2787 = vmatprep.subr.bf16.mxu0 0
    %2788 = vmatpush1.bf16.msra.mxu0 0
    %2789 = vmatprep.subr.bf16.mxu0 0
    %2790 = vmatpush1.bf16.msra.mxu0 0
    %2791 = vmatprep.mubr.bf16.mxu0 0
    %2792 = vmatmul.mubr.bf16.gmra.mrb[0].mxu0 %v2118
    %v2793 = vpop.f32.mrb[0].mxu0
    %v2794 = vadd.f32 %v2753, %v2793
    %v2795 = vpop.f32.mrb[0].mxu0
    %v2796 = vadd.f32 %v2755, %v2795
    %v2797 = vpop.f32.mrb[0].mxu0
    %v2798 = vpop.f32.mrb[0].mxu0
    %2799 = vdwg.mxu0
    %2800 = vmatprep.subr.bf16.mxu0 %v2529
    %2801 = vmatpush1.bf16.msra.mxu0 %v2528
    %2802 = vmatprep.subr.bf16.mxu0 %v2533
    %2803 = vmatpush1.bf16.msra.mxu0 %v2532
    %2804 = vmatprep.subr.bf16.mxu0 %v2537
    %2805 = vmatpush1.bf16.msra.mxu0 %v2536
    %2806 = vmatprep.subr.bf16.mxu0 %v2541
    %2807 = vmatpush1.bf16.msra.mxu0 %v2540
    %2808 = vmatprep.subr.bf16.mxu0 %v2545
    %2809 = vmatpush1.bf16.msra.mxu0 %v2544
    %2810 = vmatprep.subr.bf16.mxu0 %v2549
    %2811 = vmatpush1.bf16.msra.mxu0 %v2548
    %2812 = vmatprep.subr.bf16.mxu0 %v2553
    %2813 = vmatpush1.bf16.msra.mxu0 %v2552
    %2814 = vmatprep.subr.bf16.mxu0 %v2557
    %2815 = vmatpush1.bf16.msra.mxu0 %v2556
    %2816 = vmatprep.subr.bf16.mxu0 %v2561
    %2817 = vmatpush1.bf16.msra.mxu0 %v2560
    %2818 = vmatprep.subr.bf16.mxu0 %v2565
    %2819 = vmatpush1.bf16.msra.mxu0 %v2564
    %2820 = vmatprep.subr.bf16.mxu0 %v2569
    %2821 = vmatpush1.bf16.msra.mxu0 %v2568
    %2822 = vmatprep.subr.bf16.mxu0 %v2573
    %2823 = vmatpush1.bf16.msra.mxu0 %v2572
    %2824 = vmatprep.subr.bf16.mxu0 %v2577
    %2825 = vmatpush1.bf16.msra.mxu0 %v2576
    %2826 = vmatprep.subr.bf16.mxu0 %v2581
    %2827 = vmatpush1.bf16.msra.mxu0 %v2580
    %2828 = vmatprep.subr.bf16.mxu0 %v2585
    %2829 = vmatpush1.bf16.msra.mxu0 %v2584
    %2830 = vmatprep.subr.bf16.mxu0 %v2589
    %2831 = vmatpush1.bf16.msra.mxu0 %v2588
    %2832 = vmatprep.mubr.bf16.mxu0 %v2117
    %2833 = vmatmul.mubr.bf16.gmra.mrb[0].mxu0 %v2116
    %v2834 = vpop.f32.mrb[0].mxu0
    %v2835 = vadd.f32 %v2229, %v2834
    %v2836 = vpop.f32.mrb[0].mxu0
    %v2837 = vadd.f32 %v2233, %v2836
    %v2838 = vpop.f32.mrb[0].mxu0
    %v2839 = vpop.f32.mrb[0].mxu0
    %2840 = vdwg.mxu0
    %2841 = vmatprep.subr.bf16.mxu0 %v2593
    %2842 = vmatpush1.bf16.msra.mxu0 %v2592
    %2843 = vmatprep.subr.bf16.mxu0 %v2597
    %2844 = vmatpush1.bf16.msra.mxu0 %v2596
    %2845 = vmatprep.subr.bf16.mxu0 %v2601
    %2846 = vmatpush1.bf16.msra.mxu0 %v2600
    %2847 = vmatprep.subr.bf16.mxu0 %v2605
    %2848 = vmatpush1.bf16.msra.mxu0 %v2604
    %2849 = vmatprep.subr.bf16.mxu0 %v2609
    %2850 = vmatpush1.bf16.msra.mxu0 %v2608
    %2851 = vmatprep.subr.bf16.mxu0 %v2613
    %2852 = vmatpush1.bf16.msra.mxu0 %v2612
    %2853 = vmatprep.subr.bf16.mxu0 %v2617
    %2854 = vmatpush1.bf16.msra.mxu0 %v2616
    %2855 = vmatprep.subr.bf16.mxu0 %v2621
    %2856 = vmatpush1.bf16.msra.mxu0 %v2620
    %2857 = vmatprep.subr.bf16.mxu0 0
    %2858 = vmatpush1.bf16.msra.mxu0 0
    %2859 = vmatprep.subr.bf16.mxu0 0
    %2860 = vmatpush1.bf16.msra.mxu0 0
    %2861 = vmatprep.subr.bf16.mxu0 0
    %2862 = vmatpush1.bf16.msra.mxu0 0
    %2863 = vmatprep.subr.bf16.mxu0 0
    %2864 = vmatpush1.bf16.msra.mxu0 0
    %2865 = vmatprep.subr.bf16.mxu0 0
    %2866 = vmatpush1.bf16.msra.mxu0 0
    %2867 = vmatprep.subr.bf16.mxu0 0
    %2868 = vmatpush1.bf16.msra.mxu0 0
    %2869 = vmatprep.subr.bf16.mxu0 0
    %2870 = vmatpush1.bf16.msra.mxu0 0
    %2871 = vmatprep.subr.bf16.mxu0 0
    %2872 = vmatpush1.bf16.msra.mxu0 0
    %2873 = vmatprep.mubr.bf16.mxu0 0
    %2874 = vmatmul.mubr.bf16.gmra.mrb[0].mxu0 %v2118
    %v2875 = vpop.f32.mrb[0].mxu0
    %v2876 = vadd.f32 %v2835, %v2875
    %v2877 = vpop.f32.mrb[0].mxu0
    %v2878 = vadd.f32 %v2837, %v2877
    %v2879 = vpop.f32.mrb[0].mxu0
    %v2880 = vpop.f32.mrb[0].mxu0
    %2881 = vdwg.mxu0
    %v2886 = vcombine.low %v2794, %v2796
    %v2887 = vcombine.low %v2876, %v2878
    %v2889 = vunpack.c.l.s4 1983009808
    %v2890 = vunpack.c.0.s8 %v2889
    %v2891 = vlaneseq
    %v2892 = vshrl.u32 %v2891, 7
    %v2893 = vsub.s32 %v2890, %v2892
    %v2894 = vrot.slane %v2886, %v2893
    %v2896 = vunpack.c.l.s4 1983009808
    %v2897 = vunpack.c.0.s8 %v2896
    %v2898 = vlaneseq
    %v2899 = vshrl.u32 %v2898, 7
    %v2900 = vsub.s32 %v2897, %v2899
    %v2901 = vrot.slane %v2887, %v2900
    %v2902 = vcombine.low %v2894, %v2901
    %2904 = vst [vmem:[%s8] sm:$0xff] %v2902
    // Predicated region
    $region54: #{autencc_apply.1} parent=1 // pred_check
      _
    $region55: #{autencc_apply.1} parent=1 // pred_check_branch
      %2906 = sbr.rel (0) target = $region57
    $region56: #{autencc_apply.1} parent=1 // pred_region
      _
    $region57: #{autencc_apply.1} parent=1 // pred_fallthru
      _
    // Predicated region
    $region58: #{autencc_apply.1} parent=1 // pred_check
      _
    $region59: #{autencc_apply.1} parent=1 // pred_check_branch
      %2908 = sbr.rel (0) target = $region61
    $region60: #{autencc_apply.1} parent=1 // pred_region
      _
    $region61: #{autencc_apply.1} parent=1 // pred_fallthru
      _
    %2909 = vsyncpa [#allocation3], 1
    %2910 = vsyncpa [#allocation5], 1
    %2911 = vsyncpa [#allocation8], 1

</llo_original>
